<compile_context>
chip_gen: v7x
topology: tpu7x:2x2x1
jax: 0.10.0
libtpu: 0.0.40
codegen_flags: <defaults>
</compile_context>

<pallas_src>
import functools
import math

import jax
import jax.numpy as jnp
from jax.experimental import pallas as pl
from jax.experimental.pallas import tpu as pltpu


def _ca_sa5_kernel(x_ref, pool_ref, eh_ref, ew_ref, mask_ref, w10_ref, b10_ref,
                   w11_ref, sh2_ref, o_ref, *, H, W, HWp, Bt):
    f32 = jnp.float32

    # Constant operands (constant-index BlockSpecs -> DMA'd once, stay resident).
    P = pool_ref[...]            # (HWp, H+W) pooling indicators, 1/W & 1/H folded in
    E_h = eh_ref[...]            # (H,  HWp)  row-expansion indicators
    E_w = ew_ref[...]            # (W,  HWp)  col-expansion indicators
    w10 = w10_ref[...]           # (Cr, C)    conv10 weight, bn10 scale folded in
    b10 = b10_ref[...]           # (Cr, 1)    bn10 shift
    w11 = w11_ref[...]           # (C,  Cr)   conv11 weight
    sh2 = sh2_ref[0]             # scalar     bn2 shift (SMEM)
    C = w11.shape[0]
    inv_c = 1.0 / C

    for b in range(Bt):          # static unroll over the batch tile (constants amortized)
        x = x_ref[b].astype(f32)                                     # (C, HWp) lane-dense

        # ---- coordinate attention: single fused h/w chain -----------------------
        pooled = jnp.dot(x, P, preferred_element_type=f32)           # (C, H+W)
        y = jax.nn.relu(jnp.dot(w10, pooled, preferred_element_type=f32) + b10)
        a = jax.nn.sigmoid(jnp.dot(w11, y, preferred_element_type=f32))   # (C, H+W)
        f1 = (jnp.dot(a[:, :H], E_h, preferred_element_type=f32)
              * jnp.dot(a[:, H:], E_w, preferred_element_type=f32))       # (C, HWp)

        # ---- spatial attention: 3x3 'same' conv on the channel mean -------------
        # channel mean as a matmul (MXU) instead of a cross-sublane VPU reduction
        cm = jnp.dot(jnp.full((1, C), inv_c, f32), x,
                     preferred_element_type=f32)                      # (1, HWp)
        acc = jnp.zeros((1, HWp), f32)
        k = 0
        for dy in (-1, 0, 1):                                         # 9 static taps
            for dx in (-1, 0, 1):
                shift = (-(dy * W + dx)) % HWp
                if shift == 0:
                    shifted = cm
                else:
                    shifted = pltpu.roll(cm, shift=shift, axis=1)     # XLU lane rotation
                acc = acc + mask_ref[k:k + 1, :] * shifted            # tap*mask pre-folded
                k += 1
        f2 = jax.nn.sigmoid(acc + sh2)                                # (1, HWp)

        # ---- full gate built once, single full-size multiply, lane-dense store --
        o_ref[b] = (x * (f1 + f2)).astype(o_ref.dtype)


def _build_constants(H, W, HWp, w2_folded):
    """Host-side constant tensors (the per-step iota/compare work the kernel used
    to redo every grid step)."""
    f32 = jnp.float32
    HW = H * W
    j = jnp.arange(HWp)
    row, col = j // W, j % W
    valid = j < HW
    # pooling matrix with the mean scales folded in: (HWp, H+W)
    P_h = ((row[:, None] == jnp.arange(H)[None, :]) & valid[:, None]).astype(f32) / W
    P_w = ((col[:, None] == jnp.arange(W)[None, :]) & valid[:, None]).astype(f32) / H
    P = jnp.concatenate([P_h, P_w], axis=1)
    # expansion matrices (transposed indicators)
    E_h = ((jnp.arange(H)[:, None] == row[None, :]) & valid[None, :]).astype(f32)
    E_w = ((jnp.arange(W)[:, None] == col[None, :]) & valid[None, :]).astype(f32)
    # 3x3 boundary masks with the (bn2-scale-folded) taps baked in: (9, HWp)
    masks = []
    for iy, dy in enumerate((-1, 0, 1)):
        for ix, dx in enumerate((-1, 0, 1)):
            ok = (row + dy >= 0) & (row + dy < H) & (col + dx >= 0) & (col + dx < W)
            masks.append(ok.astype(f32) * w2_folded[iy, ix])
    masks = jnp.stack(masks, axis=0)
    return P, E_h, E_w, masks


def _choose_batch_tile(B, C, HWp):
    """Fold several batch rows into one block to amortize per-grid-step overhead,
    but always keep >=2 parallel grid points (v7x has 2 TensorCores) and a modest
    per-step working set."""
    per_elem = C * HWp * 4
    best = 1
    for bt in range(1, min(B, 8) + 1):
        if B % bt:
            continue
        if B >= 2 and B // bt < 2:
            continue
        if bt * per_elem * 8 > (24 << 20):
            continue
        best = bt
    return best


def ca_sa5(x, w10, bn10_scale, bn10_shift, w11, w2, bn2_scale, bn2_shift):
    """x: (B, C, H, W) f32.  w10: (Cr, C), w11: (C, Cr), w2: (3, 3).
    BatchNorms are given in folded inference form:
      scale = gamma / sqrt(running_var + eps), shift = beta - running_mean*scale.
    All convs in CA_SA5 are bias=False, so no conv bias terms exist."""
    B, C, H, W = x.shape
    HW = H * W
    HWp = ((HW + 127) // 128) * 128          # lane-dense pad of the flat spatial axis
    Cr = w10.shape[0]

    x_flat = x.reshape(B, C, HW)             # metadata-only reshape
    if HWp != HW:
        x_flat = jnp.pad(x_flat, ((0, 0), (0, 0), (0, HWp - HW)))

    # Host-side folding (free algebra).
    w10f = (bn10_scale[:, None] * w10).astype(jnp.float32)     # fold bn10 scale into conv10
    b10 = jnp.reshape(bn10_shift, (Cr, 1)).astype(jnp.float32)
    w2f = (w2 * bn2_scale).astype(jnp.float32)                 # fold bn2 scale into conv2
    sh2 = jnp.reshape(bn2_shift, (1,)).astype(jnp.float32)     # single SMEM scalar
    P, E_h, E_w, masks = _build_constants(H, W, HWp, w2f)

    Bt = _choose_batch_tile(B, C, HWp)
    grid = (B // Bt,)

    # Size-derived VMEM budget: double-buffered x/out blocks + resident constants
    # + in-flight f32 temporaries, plus headroom (instead of a fixed 32 MiB).
    block_bytes = Bt * C * HWp * 4
    const_bytes = 4 * (HWp * (H + W) + (H + W + 9) * HWp + Cr * C + C * Cr + Cr)
    vmem_needed = 4 * block_bytes + 2 * const_bytes + 4 * C * HWp * 4 + (4 << 20)
    vmem_limit = int(min(96 << 20, max(32 << 20, vmem_needed)))
    # TODO(synk): if vmem_needed approaches v7x's 64 MiB physical VMEM, switch to an
    # HW-tiled two-pass (pool pass, then gate-apply pass) instead of one fused slab.

    kernel = functools.partial(_ca_sa5_kernel, H=H, W=W, HWp=HWp, Bt=Bt)

    out_flat = pl.pallas_call(
        kernel,
        out_shape=jax.ShapeDtypeStruct((B, C, HWp), x.dtype),
        grid_spec=pltpu.PrefetchScalarGridSpec(
            num_scalar_prefetch=0,
            grid=grid,
            in_specs=[
                pl.BlockSpec((Bt, C, HWp), lambda i: (i, 0, 0)),   # x, lane-dense flat view
                pl.BlockSpec((HWp, H + W), lambda i: (0, 0)),      # pooling matrix (const)
                pl.BlockSpec((H, HWp), lambda i: (0, 0)),          # row expansion (const)
                pl.BlockSpec((W, HWp), lambda i: (0, 0)),          # col expansion (const)
                pl.BlockSpec((9, HWp), lambda i: (0, 0)),          # 3x3 tap*mask rows (const)
                pl.BlockSpec((Cr, C), lambda i: (0, 0)),           # conv10 weight (bn-folded)
                pl.BlockSpec((Cr, 1), lambda i: (0, 0)),           # bn10 shift
                pl.BlockSpec((C, Cr), lambda i: (0, 0)),           # conv11 weight
                pl.BlockSpec(memory_space=pltpu.MemorySpace.SMEM), # bn2 shift scalar
            ],
            out_specs=pl.BlockSpec((Bt, C, HWp), lambda i: (i, 0, 0)),
        ),
        compiler_params=pltpu.CompilerParams(
            dimension_semantics=("parallel",),     # megacore: batch blocks across TCs
            vmem_limit_bytes=vmem_limit,
        ),
    )(x_flat, P, E_h, E_w, masks, w10f, b10, w11, sh2)

    return out_flat[:, :, :HW].reshape(B, C, H, W)


def ca_sa5_reference(x, w10, s10, b10, w11, w2, s2, b2):
    """Pure-JAX mirror of the PyTorch forward (inference-mode BN)."""
    B, C, H, W = x.shape
    hi = jax.lax.Precision.HIGHEST
    x_h = jnp.mean(x, axis=3)                                   # (B, C, H)
    x_w = jnp.mean(x, axis=2)                                   # (B, C, W)
    cat = jnp.concatenate([x_h, x_w], axis=2)                   # (B, C, H+W)
    y = jnp.einsum('rc,bcl->brl', w10, cat, precision=hi)
    y = jax.nn.relu(y * s10[None, :, None] + b10[None, :, None])
    y_h, y_w = y[:, :, :H], y[:, :, H:]
    a_h = jax.nn.sigmoid(jnp.einsum('cr,brl->bcl', w11, y_h, precision=hi))
    a_w = jax.nn.sigmoid(jnp.einsum('cr,brl->bcl', w11, y_w, precision=hi))
    f1 = a_h[:, :, :, None] * a_w[:, :, None, :]                # (B, C, H, W)

    cm = jnp.mean(x, axis=1, keepdims=True)                     # (B, 1, H, W)
    p = jnp.pad(cm, ((0, 0), (0, 0), (1, 1), (1, 1)))
    conv = jnp.zeros_like(cm)
    for dy in range(3):                                         # torch Conv2d cross-correlation
        for dx in range(3):
            conv = conv + w2[dy, dx] * p[:, :, dy:dy + H, dx:dx + W]
    f2 = jax.nn.sigmoid(s2 * conv + b2)                         # (B, 1, H, W)
    return x * (f1 + f2)


if __name__ == "__main__":
    B, C, H, W = 2, 64, 16, 16        # H*W = 256 -> lane-dense (multiple of 128)
    reduction = 8
    Cr = C // reduction               # 8

    key = jax.random.PRNGKey(0)
    ks = jax.random.split(key, 8)
    x = jax.random.normal(ks[0], (B, C, H, W), dtype=jnp.float32)

    # Conv weights with kaiming-uniform-like bounds (torch default init scale).
    bw10 = 1.0 / math.sqrt(C)
    w10 = jax.random.uniform(ks[1], (Cr, C), jnp.float32, -bw10, bw10)
    bw11 = 1.0 / math.sqrt(Cr)
    w11 = jax.random.uniform(ks[2], (C, Cr), jnp.float32, -bw11, bw11)
    bw2 = 1.0 / math.sqrt(9.0)
    w2 = jax.random.uniform(ks[3], (3, 3), jnp.float32, -bw2, bw2)

    # Inference-mode BatchNorms folded to scale/shift (non-trivial values so the
    # check is meaningful).
    bn10_scale = jax.random.uniform(ks[4], (Cr,), jnp.float32, 0.5, 1.5)
    bn10_shift = jax.random.uniform(ks[5], (Cr,), jnp.float32, -0.2, 0.2)
    bn2_scale = jax.random.uniform(ks[6], (), jnp.float32, 0.5, 1.5)
    bn2_shift = jax.random.uniform(ks[7], (), jnp.float32, -0.2, 0.2)

    out = ca_sa5(x, w10, bn10_scale, bn10_shift, w11, w2, bn2_scale, bn2_shift)
    out = jax.block_until_ready(out)

    ref = ca_sa5_reference(x, w10, bn10_scale, bn10_shift, w11, w2,
                           bn2_scale, bn2_shift)
    assert out.shape == (B, C, H, W)
    # Tolerance accounts for the MXU's default f32 pass decomposition in the
    # pooling/expansion matmuls vs. the exact-precision reference (~1e-6 typical).
    assert jnp.allclose(out, ref, atol=1e-3, rtol=1e-3), "mismatch vs reference"

    print("KERNEL_OK")
</pallas_src>

<mosaic_0001>
module attributes {stable_mosaic.version = 11 : i64} {
  func.func @_ca_sa5_kernel(%arg0: i32, %arg1: memref<1x64x256xf32, #tpu.memory_space<vmem>>, %arg2: memref<256x32xf32, #tpu.memory_space<vmem>>, %arg3: memref<16x256xf32, #tpu.memory_space<vmem>>, %arg4: memref<16x256xf32, #tpu.memory_space<vmem>>, %arg5: memref<9x256xf32, #tpu.memory_space<vmem>>, %arg6: memref<8x64xf32, #tpu.memory_space<vmem>>, %arg7: memref<8x1xf32, #tpu.memory_space<vmem>>, %arg8: memref<64x8xf32, #tpu.memory_space<vmem>>, %arg9: memref<1xf32, #tpu.memory_space<smem>>, %arg10: memref<1x64x256xf32, #tpu.memory_space<vmem>>) attributes {dimension_semantics = [#tpu.dimension_semantics<parallel>], iteration_bounds = array<i64: 2>, scalar_prefetch = 0 : i64, scratch_operands = 0 : i64, tpu.core_type = #tpu.core_type<tc>, window_params = [{transform_indices = @transform_0, window_bounds = array<i64: 1, 64, 256>}, {pipeline_mode = #tpu.pipeline_mode<synchronous>, transform_indices = @transform_1, window_bounds = array<i64: 256, 32>}, {pipeline_mode = #tpu.pipeline_mode<synchronous>, transform_indices = @transform_2, window_bounds = array<i64: 16, 256>}, {pipeline_mode = #tpu.pipeline_mode<synchronous>, transform_indices = @transform_3, window_bounds = array<i64: 16, 256>}, {pipeline_mode = #tpu.pipeline_mode<synchronous>, transform_indices = @transform_4, window_bounds = array<i64: 9, 256>}, {pipeline_mode = #tpu.pipeline_mode<synchronous>, transform_indices = @transform_5, window_bounds = array<i64: 8, 64>}, {pipeline_mode = #tpu.pipeline_mode<synchronous>, transform_indices = @transform_6, window_bounds = array<i64: 8, 1>}, {pipeline_mode = #tpu.pipeline_mode<synchronous>, transform_indices = @transform_7, window_bounds = array<i64: 64, 8>}, {transform_indices = @transform_8, window_bounds = array<i64: 1>}, {transform_indices = @transform_9, window_bounds = array<i64: 1, 64, 256>}]} {
    %c0 = arith.constant 0 : index
    %c0_0 = arith.constant 0 : index
    %0 = vector.load %arg2[%c0, %c0_0] : memref<256x32xf32, #tpu.memory_space<vmem>>, vector<256x32xf32>
    %c0_1 = arith.constant 0 : index
    %c0_2 = arith.constant 0 : index
    %1 = vector.load %arg3[%c0_1, %c0_2] : memref<16x256xf32, #tpu.memory_space<vmem>>, vector<16x256xf32>
    %c0_3 = arith.constant 0 : index
    %c0_4 = arith.constant 0 : index
    %2 = vector.load %arg4[%c0_3, %c0_4] : memref<16x256xf32, #tpu.memory_space<vmem>>, vector<16x256xf32>
    %c0_5 = arith.constant 0 : index
    %c0_6 = arith.constant 0 : index
    %3 = vector.load %arg6[%c0_5, %c0_6] : memref<8x64xf32, #tpu.memory_space<vmem>>, vector<8x64xf32>
    %c0_7 = arith.constant 0 : index
    %c0_8 = arith.constant 0 : index
    %4 = vector.load %arg7[%c0_7, %c0_8] : memref<8x1xf32, #tpu.memory_space<vmem>>, vector<8x1xf32>
    %c0_9 = arith.constant 0 : index
    %c0_10 = arith.constant 0 : index
    %5 = vector.load %arg8[%c0_9, %c0_10] : memref<64x8xf32, #tpu.memory_space<vmem>>, vector<64x8xf32>
    %c0_11 = arith.constant 0 : index
    %6 = memref.load %arg9[%c0_11] : memref<1xf32, #tpu.memory_space<smem>>
    %c0_12 = arith.constant 0 : index
    %c0_13 = arith.constant 0 : index
    %c0_14 = arith.constant 0 : index
    %7 = vector.load %arg1[%c0_12, %c0_13, %c0_14] : memref<1x64x256xf32, #tpu.memory_space<vmem>>, vector<1x64x256xf32>
    %8 = vector.shape_cast %7 : vector<1x64x256xf32> to vector<64x256xf32>
    %cst = arith.constant dense<0.000000e+00> : vector<64x32xf32>
    %9 = tpu.matmul %8, %0, %cst {dimension_numbers = #tpu.dot_dimension_numbers<[1], [0], [0], [1], [0, 0, 1, 1], [], []>} : vector<64x256xf32>, vector<256x32xf32>, vector<64x32xf32> -> vector<64x32xf32>
    %cst_15 = arith.constant dense<0.000000e+00> : vector<8x32xf32>
    %10 = tpu.matmul %3, %9, %cst_15 {dimension_numbers = #tpu.dot_dimension_numbers<[1], [0], [0], [1], [0, 0, 1, 1], [], []>} : vector<8x64xf32>, vector<64x32xf32>, vector<8x32xf32> -> vector<8x32xf32>
    %11 = vector.broadcast %4 : vector<8x1xf32> to vector<8x32xf32>
    %12 = arith.addf %10, %11 : vector<8x32xf32>
    %cst_16 = arith.constant 0.000000e+00 : f32
    %13 = vector.broadcast %cst_16 : f32 to vector<8x32xf32>
    %14 = arith.maximumf %12, %13 : vector<8x32xf32>
    %cst_17 = arith.constant dense<0.000000e+00> : vector<64x32xf32>
    %15 = tpu.matmul %5, %14, %cst_17 {dimension_numbers = #tpu.dot_dimension_numbers<[1], [0], [0], [1], [0, 0, 1, 1], [], []>} : vector<64x8xf32>, vector<8x32xf32>, vector<64x32xf32> -> vector<64x32xf32>
    %16 = arith.negf %15 : vector<64x32xf32>
    %17 = math.exp %16 : vector<64x32xf32>
    %cst_18 = arith.constant 1.000000e+00 : f32
    %18 = vector.broadcast %cst_18 : f32 to vector<64x32xf32>
    %19 = arith.addf %18, %17 : vector<64x32xf32>
    %20 = arith.divf %18, %19 : vector<64x32xf32>
    %21 = vector.extract_strided_slice %20 {offsets = [0, 0], sizes = [64, 16], strides = [1, 1]} : vector<64x32xf32> to vector<64x16xf32>
    %cst_19 = arith.constant dense<0.000000e+00> : vector<64x256xf32>
    %22 = tpu.matmul %21, %1, %cst_19 {dimension_numbers = #tpu.dot_dimension_numbers<[1], [0], [0], [1], [0, 0, 1, 1], [], []>} : vector<64x16xf32>, vector<16x256xf32>, vector<64x256xf32> -> vector<64x256xf32>
    %23 = vector.extract_strided_slice %20 {offsets = [0, 16], sizes = [64, 16], strides = [1, 1]} : vector<64x32xf32> to vector<64x16xf32>
    %cst_20 = arith.constant dense<0.000000e+00> : vector<64x256xf32>
    %24 = tpu.matmul %23, %2, %cst_20 {dimension_numbers = #tpu.dot_dimension_numbers<[1], [0], [0], [1], [0, 0, 1, 1], [], []>} : vector<64x16xf32>, vector<16x256xf32>, vector<64x256xf32> -> vector<64x256xf32>
    %25 = arith.mulf %22, %24 : vector<64x256xf32>
    %cst_21 = arith.constant 1.562500e-02 : f32
    %26 = vector.broadcast %cst_21 : f32 to vector<1x64xf32>
    %cst_22 = arith.constant dense<0.000000e+00> : vector<1x256xf32>
    %27 = tpu.matmul %26, %8, %cst_22 {dimension_numbers = #tpu.dot_dimension_numbers<[1], [0], [0], [1], [0, 0, 1, 1], [], []>} : vector<1x64xf32>, vector<64x256xf32>, vector<1x256xf32> -> vector<1x256xf32>
    %cst_23 = arith.constant 0.000000e+00 : f32
    %28 = vector.broadcast %cst_23 : f32 to vector<1x256xf32>
    %c17_i32 = arith.constant 17 : i32
    %29 = tpu.dynamic_rotate %27 by %c17_i32 dim 1 : vector<1x256xf32>, i32 -> vector<1x256xf32>
    %c0_24 = arith.constant 0 : index
    %c0_25 = arith.constant 0 : index
    %30 = vector.load %arg5[%c0_24, %c0_25] : memref<9x256xf32, #tpu.memory_space<vmem>>, vector<1x256xf32>
    %31 = arith.mulf %30, %29 : vector<1x256xf32>
    %32 = arith.addf %28, %31 : vector<1x256xf32>
    %c16_i32 = arith.constant 16 : i32
    %33 = tpu.dynamic_rotate %27 by %c16_i32 dim 1 : vector<1x256xf32>, i32 -> vector<1x256xf32>
    %c1 = arith.constant 1 : index
    %c0_26 = arith.constant 0 : index
    %34 = vector.load %arg5[%c1, %c0_26] : memref<9x256xf32, #tpu.memory_space<vmem>>, vector<1x256xf32>
    %35 = arith.mulf %34, %33 : vector<1x256xf32>
    %36 = arith.addf %32, %35 : vector<1x256xf32>
    %c15_i32 = arith.constant 15 : i32
    %37 = tpu.dynamic_rotate %27 by %c15_i32 dim 1 : vector<1x256xf32>, i32 -> vector<1x256xf32>
    %c2 = arith.constant 2 : index
    %c0_27 = arith.constant 0 : index
    %38 = vector.load %arg5[%c2, %c0_27] : memref<9x256xf32, #tpu.memory_space<vmem>>, vector<1x256xf32>
    %39 = arith.mulf %38, %37 : vector<1x256xf32>
    %40 = arith.addf %36, %39 : vector<1x256xf32>
    %c1_i32 = arith.constant 1 : i32
    %41 = tpu.dynamic_rotate %27 by %c1_i32 dim 1 : vector<1x256xf32>, i32 -> vector<1x256xf32>
    %c3 = arith.constant 3 : index
    %c0_28 = arith.constant 0 : index
    %42 = vector.load %arg5[%c3, %c0_28] : memref<9x256xf32, #tpu.memory_space<vmem>>, vector<1x256xf32>
    %43 = arith.mulf %42, %41 : vector<1x256xf32>
    %44 = arith.addf %40, %43 : vector<1x256xf32>
    %c4 = arith.constant 4 : index
    %c0_29 = arith.constant 0 : index
    %45 = vector.load %arg5[%c4, %c0_29] : memref<9x256xf32, #tpu.memory_space<vmem>>, vector<1x256xf32>
    %46 = arith.mulf %45, %27 : vector<1x256xf32>
    %47 = arith.addf %44, %46 : vector<1x256xf32>
    %c255_i32 = arith.constant 255 : i32
    %48 = tpu.dynamic_rotate %27 by %c255_i32 dim 1 : vector<1x256xf32>, i32 -> vector<1x256xf32>
    %c5 = arith.constant 5 : index
    %c0_30 = arith.constant 0 : index
    %49 = vector.load %arg5[%c5, %c0_30] : memref<9x256xf32, #tpu.memory_space<vmem>>, vector<1x256xf32>
    %50 = arith.mulf %49, %48 : vector<1x256xf32>
    %51 = arith.addf %47, %50 : vector<1x256xf32>
    %c241_i32 = arith.constant 241 : i32
    %52 = tpu.dynamic_rotate %27 by %c241_i32 dim 1 : vector<1x256xf32>, i32 -> vector<1x256xf32>
    %c6 = arith.constant 6 : index
    %c0_31 = arith.constant 0 : index
    %53 = vector.load %arg5[%c6, %c0_31] : memref<9x256xf32, #tpu.memory_space<vmem>>, vector<1x256xf32>
    %54 = arith.mulf %53, %52 : vector<1x256xf32>
    %55 = arith.addf %51, %54 : vector<1x256xf32>
    %c240_i32 = arith.constant 240 : i32
    %56 = tpu.dynamic_rotate %27 by %c240_i32 dim 1 : vector<1x256xf32>, i32 -> vector<1x256xf32>
    %c7 = arith.constant 7 : index
    %c0_32 = arith.constant 0 : index
    %57 = vector.load %arg5[%c7, %c0_32] : memref<9x256xf32, #tpu.memory_space<vmem>>, vector<1x256xf32>
    %58 = arith.mulf %57, %56 : vector<1x256xf32>
    %59 = arith.addf %55, %58 : vector<1x256xf32>
    %c239_i32 = arith.constant 239 : i32
    %60 = tpu.dynamic_rotate %27 by %c239_i32 dim 1 : vector<1x256xf32>, i32 -> vector<1x256xf32>
    %c8 = arith.constant 8 : index
    %c0_33 = arith.constant 0 : index
    %61 = vector.load %arg5[%c8, %c0_33] : memref<9x256xf32, #tpu.memory_space<vmem>>, vector<1x256xf32>
    %62 = arith.mulf %61, %60 : vector<1x256xf32>
    %63 = arith.addf %59, %62 : vector<1x256xf32>
    %64 = vector.broadcast %6 : f32 to vector<1x256xf32>
    %65 = arith.addf %63, %64 : vector<1x256xf32>
    %66 = arith.negf %65 : vector<1x256xf32>
    %67 = math.exp %66 : vector<1x256xf32>
    %cst_34 = arith.constant 1.000000e+00 : f32
    %68 = vector.broadcast %cst_34 : f32 to vector<1x256xf32>
    %69 = arith.addf %68, %67 : vector<1x256xf32>
    %70 = arith.divf %68, %69 : vector<1x256xf32>
    %71 = vector.broadcast %70 : vector<1x256xf32> to vector<64x256xf32>
    %72 = arith.addf %25, %71 : vector<64x256xf32>
    %73 = arith.mulf %8, %72 : vector<64x256xf32>
    %c0_35 = arith.constant 0 : index
    %c0_36 = arith.constant 0 : index
    %c0_37 = arith.constant 0 : index
    %74 = vector.load %arg10[%c0_35, %c0_36, %c0_37] : memref<1x64x256xf32, #tpu.memory_space<vmem>>, vector<1x64x256xf32>
    %75 = vector.shape_cast %74 : vector<1x64x256xf32> to vector<64x256xf32>
    %76 = vector.shape_cast %73 : vector<64x256xf32> to vector<1x64x256xf32>
    tpu.vector_store %arg10[%c0_35, %c0_36, %c0_37], %76 {strides = array<i32>} : memref<1x64x256xf32, #tpu.memory_space<vmem>>, vector<1x64x256xf32>,
    return
  }
  func.func @transform_0(%arg0: i32) -> (i32, i32, i32) {
    %c0_i32 = arith.constant 0 : i32
    %c0_i32_0 = arith.constant 0 : i32
    %c0_i32_1 = arith.constant 0 : i32
    return %arg0, %c0_i32, %c0_i32_0 : i32, i32, i32
  }
  func.func @transform_1(%arg0: i32) -> (i32, i32) {
    %c0_i32 = arith.constant 0 : i32
    %c0_i32_0 = arith.constant 0 : i32
    %c0_i32_1 = arith.constant 0 : i32
    return %c0_i32, %c0_i32_0 : i32, i32
  }
  func.func @transform_2(%arg0: i32) -> (i32, i32) {
    %c0_i32 = arith.constant 0 : i32
    %c0_i32_0 = arith.constant 0 : i32
    %c0_i32_1 = arith.constant 0 : i32
    return %c0_i32, %c0_i32_0 : i32, i32
  }
  func.func @transform_3(%arg0: i32) -> (i32, i32) {
    %c0_i32 = arith.constant 0 : i32
    %c0_i32_0 = arith.constant 0 : i32
    %c0_i32_1 = arith.constant 0 : i32
    return %c0_i32, %c0_i32_0 : i32, i32
  }
  func.func @transform_4(%arg0: i32) -> (i32, i32) {
    %c0_i32 = arith.constant 0 : i32
    %c0_i32_0 = arith.constant 0 : i32
    %c0_i32_1 = arith.constant 0 : i32
    return %c0_i32, %c0_i32_0 : i32, i32
  }
  func.func @transform_5(%arg0: i32) -> (i32, i32) {
    %c0_i32 = arith.constant 0 : i32
    %c0_i32_0 = arith.constant 0 : i32
    %c0_i32_1 = arith.constant 0 : i32
    return %c0_i32, %c0_i32_0 : i32, i32
  }
  func.func @transform_6(%arg0: i32) -> (i32, i32) {
    %c0_i32 = arith.constant 0 : i32
    %c0_i32_0 = arith.constant 0 : i32
    %c0_i32_1 = arith.constant 0 : i32
    return %c0_i32, %c0_i32_0 : i32, i32
  }
  func.func @transform_7(%arg0: i32) -> (i32, i32) {
    %c0_i32 = arith.constant 0 : i32
    %c0_i32_0 = arith.constant 0 : i32
    %c0_i32_1 = arith.constant 0 : i32
    return %c0_i32, %c0_i32_0 : i32, i32
  }
  func.func @transform_8(%arg0: i32) -> i32 {
    %c0_i32 = arith.constant 0 : i32
    %c0_i32_0 = arith.constant 0 : i32
    return %c0_i32 : i32
  }
  func.func @transform_9(%arg0: i32) -> (i32, i32, i32) {
    %c0_i32 = arith.constant 0 : i32
    %c0_i32_0 = arith.constant 0 : i32
    %c0_i32_1 = arith.constant 0 : i32
    return %arg0, %c0_i32, %c0_i32_0 : i32, i32, i32
  }
}

</mosaic_0001>

<llo_original>
// kernel: tpu_custom_call.1
$region0: #{tpu_custom_call.1}
  #allocation0 [shape = 'u32[]', space=smem, size = 0x4, offset = 0x4, fixed_abs, tag = 'smem constant byte address 0x4 - core index']
  #allocation1 [shape = 'u32[144,128]{1,0:T(1,128)}', space=vmem, size = 0x12000, scoped, tag = 'internal scratch']
  #allocation2 [shape = 'f32[1]{0:T(128)S(6)}', space=smem, size = 0x200, scoped, tag = 'scoped memory for tpu_custom_call.1']
  %s0 = inlined_call_operand.vmem [shape: f32[2,64,256], index: 0, kind: input, shape index: {}]
  %s1 = inlined_call_operand.vmem [shape: f32[256,32], index: 1, kind: input, shape index: {}]
  %s2 = inlined_call_operand.vmem [shape: f32[16,256], index: 2, kind: input, shape index: {}]
  %s3 = inlined_call_operand.vmem [shape: f32[16,256], index: 3, kind: input, shape index: {}]
  %s4 = inlined_call_operand.vmem [shape: f32[9,256], index: 4, kind: input, shape index: {}]
  %s5 = inlined_call_operand.hbm [shape: f32[8,64], index: 5, kind: input, shape index: {}]
  %s6 = inlined_call_operand.vmem [shape: f32[8,1], index: 6, kind: input, shape index: {}]
  %s7 = inlined_call_operand.vmem [shape: f32[64,8], index: 7, kind: input, shape index: {}]
  %s8 = inlined_call_operand.<no memory space> [shape: f32[1], index: 8, kind: input, shape index: {}]
  %s9 = inlined_call_operand.hbm [shape: f32[2,64,256], index: 9, kind: output, shape index: {}]
  %s10 = sld [smem:[#allocation0]]
  $region73: #{tpu_custom_call.1} parent=0
    _
  %s12 = ssub.s32 1, %s10
  %s13 = scalar_select 0, %s12, %s10
  %14 = sst [smem:[#allocation2]] %s8
  $region1: #{tpu_custom_call.1} parent=0
    #allocation3 [shape = 'u8[4096]{0}', space=vmem, size = 0x1000, scoped, tag = 'input window, operand 5, single buffered']
    #allocation4 [shape = 's32[2]{0}', space=sflag, size = 0x8, scoped, tag = 'scoped memory for tpu_custom_call.1']
    #allocation5 [shape = 's32[2]{0}', space=sflag, size = 0x8, scoped, tag = 'scoped memory for tpu_custom_call.1']
    #allocation6 [shape = 'u8[131072]{0}', space=vmem, size = 0x20000, scoped, tag = 'output window, operand 0']
    %15 = vsyncpa [#allocation4], 0
    %16 = vsyncpa [#allocation5], 0
    %s17 = scalar_lea.sflag [#allocation5], 1
    %18 = vsyncpa %s17, 0
    loop: start=0, step=1, limit=4
    $region2: #{tpu_custom_call.1} parent=1 // loop_pre_header
      _
    $region3: #{tpu_custom_call.1} parent=1 // loop_header
      %s20 = sphi 0, %s24
      %p21 = scmp.ge.s32.totalorder %s20, 4
      %s30 = sphi 0, %s32
      %s33 = sphi 0, %s30
      %s34 = sphi 0, %s33
      %s50 = sphi 0, %s34
      %s54 = sphi 0, %s54
      %s56 = sphi 0, %s54
      %s57 = sphi 0, %s56
      %s71 = sphi 0, %s57
      %s75 = sphi 0, %s75
      %s77 = sphi 0, %s75
      %s78 = sphi 0, %s77
      %s92 = sphi 0, %s78
      %s96 = sphi 0, %s96
      %s98 = sphi 0, %s96
      %s99 = sphi 0, %s98
      %s113 = sphi 0, %s99
      %s117 = sphi 0, %s117
      %s119 = sphi 0, %s117
      %s120 = sphi 0, %s119
      %s134 = sphi 0, %s120
      %s138 = sphi 0, %s138
      %s140 = sphi 0, %s138
      %s141 = sphi 0, %s140
      %s155 = sphi 0, %s141
      %s159 = sphi 0, %s159
      %s161 = sphi 0, %s159
      %s162 = sphi 0, %s161
      %s176 = sphi 0, %s162
      %s180 = sphi 0, %s180
      %s182 = sphi 0, %s180
      %s183 = sphi 0, %s182
      %s197 = sphi 0, %s183
      %s201 = sphi 0, %s201
      %s203 = sphi 0, %s201
      %s204 = sphi 0, %s203
      %s218 = sphi 0, %s204
      %s224 = sphi 0, %s226
      %s227 = sphi 0, %s224
      %s228 = sphi 0, %s227
      %s244 = sphi 0, %s228
    $region4: #{tpu_custom_call.1} parent=1 // loop_header_branch
      %23 = sbr.rel (%p21) target = $region8
    $region5: #{tpu_custom_call.1} parent=1 // loop_body
      %s25 = ssub.s32 %s20, 1
      %s26 = ssub.s32 %s20, 2
      %s27 = sadd.s32 %s20, 1
      %s28 = ssub.s32 %s20, %s27
      %p29 = scmp.eq.s32.totalorder %s28, 0
      %s31 = sadd.s32 %s30, 1
      %s32 = scalar_select %p29, %s30, %s31
      %p35 = pneg %p29
      %p36 = scmp.eq.s32.totalorder %s20, 1
      %p37 = por %p35, %p36
      %p38 = scmp.ne.s32.totalorder %s30, %s33
      %p39 = scmp.eq.s32.totalorder %s20, 0
      %p40 = por %p38, %p39
      %p41 = scmp.ne.s32.totalorder %s30, %s33
      %p42 = scmp.eq.s32.totalorder %s25, 1
      %p43 = por %p41, %p42
      %p44 = scmp.ne.s32.totalorder %s33, %s34
      %p45 = scmp.eq.s32.totalorder %s25, 0
      %p46 = por %p44, %p45
      %p47 = scmp.ne.s32.totalorder %s33, %s34
      %p48 = scmp.eq.s32.totalorder %s26, 1
      %p49 = por %p47, %p48
      %p51 = scmp.ne.s32.totalorder %s34, %s50
      %p52 = scmp.eq.s32.totalorder %s26, 0
      %p53 = por %p51, %p52
      %s55 = sadd.s32 %s54, 1
      %p58 = scmp.eq.s32.totalorder %s20, 1
      %p59 = scmp.ne.s32.totalorder %s54, %s56
      %p60 = scmp.eq.s32.totalorder %s20, 0
      %p61 = por %p59, %p60
      %p62 = scmp.ne.s32.totalorder %s54, %s56
      %p63 = scmp.eq.s32.totalorder %s25, 1
      %p64 = por %p62, %p63
      %p65 = scmp.ne.s32.totalorder %s56, %s57
      %p66 = scmp.eq.s32.totalorder %s25, 0
      %p67 = por %p65, %p66
      %p68 = scmp.ne.s32.totalorder %s56, %s57
      %p69 = scmp.eq.s32.totalorder %s26, 1
      %p70 = por %p68, %p69
      %p72 = scmp.ne.s32.totalorder %s57, %s71
      %p73 = scmp.eq.s32.totalorder %s26, 0
      %p74 = por %p72, %p73
      %s76 = sadd.s32 %s75, 1
      %p79 = scmp.eq.s32.totalorder %s20, 1
      %p80 = scmp.ne.s32.totalorder %s75, %s77
      %p81 = scmp.eq.s32.totalorder %s20, 0
      %p82 = por %p80, %p81
      %p83 = scmp.ne.s32.totalorder %s75, %s77
      %p84 = scmp.eq.s32.totalorder %s25, 1
      %p85 = por %p83, %p84
      %p86 = scmp.ne.s32.totalorder %s77, %s78
      %p87 = scmp.eq.s32.totalorder %s25, 0
      %p88 = por %p86, %p87
      %p89 = scmp.ne.s32.totalorder %s77, %s78
      %p90 = scmp.eq.s32.totalorder %s26, 1
      %p91 = por %p89, %p90
      %p93 = scmp.ne.s32.totalorder %s78, %s92
      %p94 = scmp.eq.s32.totalorder %s26, 0
      %p95 = por %p93, %p94
      %s97 = sadd.s32 %s96, 1
      %p100 = scmp.eq.s32.totalorder %s20, 1
      %p101 = scmp.ne.s32.totalorder %s96, %s98
      %p102 = scmp.eq.s32.totalorder %s20, 0
      %p103 = por %p101, %p102
      %p104 = scmp.ne.s32.totalorder %s96, %s98
      %p105 = scmp.eq.s32.totalorder %s25, 1
      %p106 = por %p104, %p105
      %p107 = scmp.ne.s32.totalorder %s98, %s99
      %p108 = scmp.eq.s32.totalorder %s25, 0
      %p109 = por %p107, %p108
      %p110 = scmp.ne.s32.totalorder %s98, %s99
      %p111 = scmp.eq.s32.totalorder %s26, 1
      %p112 = por %p110, %p111
      %p114 = scmp.ne.s32.totalorder %s99, %s113
      %p115 = scmp.eq.s32.totalorder %s26, 0
      %p116 = por %p114, %p115
      %s118 = sadd.s32 %s117, 1
      %p121 = scmp.eq.s32.totalorder %s20, 1
      %p122 = scmp.ne.s32.totalorder %s117, %s119
      %p123 = scmp.eq.s32.totalorder %s20, 0
      %p124 = por %p122, %p123
      %p125 = scmp.ne.s32.totalorder %s117, %s119
      %p126 = scmp.eq.s32.totalorder %s25, 1
      %p127 = por %p125, %p126
      %p128 = scmp.ne.s32.totalorder %s119, %s120
      %p129 = scmp.eq.s32.totalorder %s25, 0
      %p130 = por %p128, %p129
      %p131 = scmp.ne.s32.totalorder %s119, %s120
      %p132 = scmp.eq.s32.totalorder %s26, 1
      %p133 = por %p131, %p132
      %p135 = scmp.ne.s32.totalorder %s120, %s134
      %p136 = scmp.eq.s32.totalorder %s26, 0
      %p137 = por %p135, %p136
      %s139 = sadd.s32 %s138, 1
      %p142 = scmp.eq.s32.totalorder %s20, 1
      %p143 = scmp.ne.s32.totalorder %s138, %s140
      %p144 = scmp.eq.s32.totalorder %s20, 0
      %p145 = por %p143, %p144
      %p146 = scmp.ne.s32.totalorder %s138, %s140
      %p147 = scmp.eq.s32.totalorder %s25, 1
      %p148 = por %p146, %p147
      %p149 = scmp.ne.s32.totalorder %s140, %s141
      %p150 = scmp.eq.s32.totalorder %s25, 0
      %p151 = por %p149, %p150
      %p152 = scmp.ne.s32.totalorder %s140, %s141
      %p153 = scmp.eq.s32.totalorder %s26, 1
      %p154 = por %p152, %p153
      %p156 = scmp.ne.s32.totalorder %s141, %s155
      %p157 = scmp.eq.s32.totalorder %s26, 0
      %p158 = por %p156, %p157
      %s160 = sadd.s32 %s159, 1
      %p163 = scmp.eq.s32.totalorder %s20, 1
      %p164 = scmp.ne.s32.totalorder %s159, %s161
      %p165 = scmp.eq.s32.totalorder %s20, 0
      %p166 = por %p164, %p165
      %p167 = scmp.ne.s32.totalorder %s159, %s161
      %p168 = scmp.eq.s32.totalorder %s25, 1
      %p169 = por %p167, %p168
      %p170 = scmp.ne.s32.totalorder %s161, %s162
      %p171 = scmp.eq.s32.totalorder %s25, 0
      %p172 = por %p170, %p171
      %p173 = scmp.ne.s32.totalorder %s161, %s162
      %p174 = scmp.eq.s32.totalorder %s26, 1
      %p175 = por %p173, %p174
      %p177 = scmp.ne.s32.totalorder %s162, %s176
      %p178 = scmp.eq.s32.totalorder %s26, 0
      %p179 = por %p177, %p178
      %s181 = sadd.s32 %s180, 1
      %p184 = scmp.eq.s32.totalorder %s20, 1
      %p185 = scmp.ne.s32.totalorder %s180, %s182
      %p186 = scmp.eq.s32.totalorder %s20, 0
      %p187 = por %p185, %p186
      %p188 = scmp.ne.s32.totalorder %s180, %s182
      %p189 = scmp.eq.s32.totalorder %s25, 1
      %p190 = por %p188, %p189
      %p191 = scmp.ne.s32.totalorder %s182, %s183
      %p192 = scmp.eq.s32.totalorder %s25, 0
      %p193 = por %p191, %p192
      %p194 = scmp.ne.s32.totalorder %s182, %s183
      %p195 = scmp.eq.s32.totalorder %s26, 1
      %p196 = por %p194, %p195
      %p198 = scmp.ne.s32.totalorder %s183, %s197
      %p199 = scmp.eq.s32.totalorder %s26, 0
      %p200 = por %p198, %p199
      %s202 = sadd.s32 %s201, 1
      %p205 = scmp.eq.s32.totalorder %s20, 1
      %p206 = scmp.ne.s32.totalorder %s201, %s203
      %p207 = scmp.eq.s32.totalorder %s20, 0
      %p208 = por %p206, %p207
      %p209 = scmp.ne.s32.totalorder %s201, %s203
      %p210 = scmp.eq.s32.totalorder %s25, 1
      %p211 = por %p209, %p210
      %p212 = scmp.ne.s32.totalorder %s203, %s204
      %p213 = scmp.eq.s32.totalorder %s25, 0
      %p214 = por %p212, %p213
      %p215 = scmp.ne.s32.totalorder %s203, %s204
      %p216 = scmp.eq.s32.totalorder %s26, 1
      %p217 = por %p215, %p216
      %p219 = scmp.ne.s32.totalorder %s204, %s218
      %p220 = scmp.eq.s32.totalorder %s26, 0
      %p221 = por %p219, %p220
      %s222 = ssub.s32 %s20, %s27
      %p223 = scmp.eq.s32.totalorder %s222, 0
      %s225 = sadd.s32 %s224, 1
      %s226 = scalar_select %p223, %s224, %s225
      %p229 = pneg %p223
      %p230 = scmp.eq.s32.totalorder %s20, 1
      %p231 = por %p229, %p230
      %p232 = scmp.ne.s32.totalorder %s224, %s227
      %p233 = scmp.eq.s32.totalorder %s20, 0
      %p234 = por %p232, %p233
      %p235 = scmp.ne.s32.totalorder %s224, %s227
      %p236 = scmp.eq.s32.totalorder %s25, 1
      %p237 = por %p235, %p236
      %p238 = scmp.ne.s32.totalorder %s227, %s228
      %p239 = scmp.eq.s32.totalorder %s25, 0
      %p240 = por %p238, %p239
      %p241 = scmp.ne.s32.totalorder %s227, %s228
      %p242 = scmp.eq.s32.totalorder %s26, 1
      %p243 = por %p241, %p242
      %p245 = scmp.ne.s32.totalorder %s228, %s244
      %p246 = scmp.eq.s32.totalorder %s26, 0
      %p247 = por %p245, %p246
      %p248 = scmp.le.s32.totalorder 1, %s20
      %p249 = scmp.lt.s32.totalorder %s20, 3
      %p250 = pnand %p248, %p249
      %p251 = pneg %p250
      // Predicated region
      $region9: #{tpu_custom_call.1} parent=5 // pred_check
        _
      $region10: #{tpu_custom_call.1} parent=5 // pred_check_branch
        %253 = sbr.rel (%p250) target = $region12
      $region11: #{tpu_custom_call.1} parent=5 // pred_region
        %s254 = ssub.s32 %s20, 1
        // Predicated region
        $region13: #{tpu_custom_call.1} parent=11 // pred_check
          %p255 = pneg %p67
        $region14: #{tpu_custom_call.1} parent=11 // pred_check_branch
          %257 = sbr.rel (%p255) target = $region16
        $region15: #{tpu_custom_call.1} parent=11 // pred_region
          _
        $region16: #{tpu_custom_call.1} parent=11 // pred_fallthru
          _
        // Predicated region
        $region17: #{tpu_custom_call.1} parent=11 // pred_check
          %p258 = pneg %p88
        $region18: #{tpu_custom_call.1} parent=11 // pred_check_branch
          %260 = sbr.rel (%p258) target = $region20
        $region19: #{tpu_custom_call.1} parent=11 // pred_region
          _
        $region20: #{tpu_custom_call.1} parent=11 // pred_fallthru
          _
        // Predicated region
        $region21: #{tpu_custom_call.1} parent=11 // pred_check
          %p261 = pneg %p109
        $region22: #{tpu_custom_call.1} parent=11 // pred_check_branch
          %263 = sbr.rel (%p261) target = $region24
        $region23: #{tpu_custom_call.1} parent=11 // pred_region
          _
        $region24: #{tpu_custom_call.1} parent=11 // pred_fallthru
          _
        // Predicated region
        $region25: #{tpu_custom_call.1} parent=11 // pred_check
          %p264 = pneg %p130
        $region26: #{tpu_custom_call.1} parent=11 // pred_check_branch
          %266 = sbr.rel (%p264) target = $region28
        $region27: #{tpu_custom_call.1} parent=11 // pred_region
          _
        $region28: #{tpu_custom_call.1} parent=11 // pred_fallthru
          _
        // Predicated region
        $region29: #{tpu_custom_call.1} parent=11 // pred_check
          %p267 = pneg %p151
        $region30: #{tpu_custom_call.1} parent=11 // pred_check_branch
          %269 = sbr.rel (%p267) target = $region32
        $region31: #{tpu_custom_call.1} parent=11 // pred_region
          %s271 = ssub.s32 128, 128
          %272 = vsyncadd [#allocation4], %s271
          %s274 = sshll.u32 [#allocation3], 4
          %s275 = int_to_ptr.vmem [resolvable:$true] %s274
          %277 = dma.hbm_to_vmem [thread:$0]  %s5, 128, %s275, [#allocation4]
        $region32: #{tpu_custom_call.1} parent=11 // pred_fallthru
          _
        // Predicated region
        $region33: #{tpu_custom_call.1} parent=11 // pred_check
          %p278 = pneg %p172
        $region34: #{tpu_custom_call.1} parent=11 // pred_check_branch
          %280 = sbr.rel (%p278) target = $region36
        $region35: #{tpu_custom_call.1} parent=11 // pred_region
          _
        $region36: #{tpu_custom_call.1} parent=11 // pred_fallthru
          _
        // Predicated region
        $region37: #{tpu_custom_call.1} parent=11 // pred_check
          %p281 = pneg %p193
        $region38: #{tpu_custom_call.1} parent=11 // pred_check_branch
          %283 = sbr.rel (%p281) target = $region40
        $region39: #{tpu_custom_call.1} parent=11 // pred_region
          _
        $region40: #{tpu_custom_call.1} parent=11 // pred_fallthru
          _
        // Predicated region
        $region41: #{tpu_custom_call.1} parent=11 // pred_check
          %p284 = pneg %p214
        $region42: #{tpu_custom_call.1} parent=11 // pred_check_branch
          %286 = sbr.rel (%p284) target = $region44
        $region43: #{tpu_custom_call.1} parent=11 // pred_region
          _
        $region44: #{tpu_custom_call.1} parent=11 // pred_fallthru
          _
      $region12: #{tpu_custom_call.1} parent=5 // pred_fallthru
        _
      %p287 = scmp.lt.s32.totalorder %s20, 2
      // Predicated region
      $region45: #{tpu_custom_call.1} parent=5 // pred_check
        %p288 = pneg %p287
      $region46: #{tpu_custom_call.1} parent=5 // pred_check_branch
        %290 = sbr.rel (%p288) target = $region48
      $region47: #{tpu_custom_call.1} parent=5 // pred_region
        // Predicated region
        $region49: #{tpu_custom_call.1} parent=47 // pred_check
          %p291 = pneg %p40
        $region50: #{tpu_custom_call.1} parent=47 // pred_check_branch
          %293 = sbr.rel (%p291) target = $region52
        $region51: #{tpu_custom_call.1} parent=47 // pred_region
          %p294 = scmp.lt.s32.totalorder %s20, 1
          %s295 = scalar_select %p294, %s20, 1
          %s296 = smul.addr %s295, 16
          %s297 = smul.addr %s296, 8
          %s298 = scalar_lea.vmem %s0, %s297
        $region52: #{tpu_custom_call.1} parent=47 // pred_fallthru
          _
      $region48: #{tpu_custom_call.1} parent=5 // pred_fallthru
        _
      %p299 = scmp.le.s32.totalorder 1, %s20
      %p300 = scmp.lt.s32.totalorder %s20, 3
      %p301 = pnand %p299, %p300
      %p302 = pneg %p301
      // Predicated region
      $region53: #{tpu_custom_call.1} parent=5 // pred_check
        _
      $region54: #{tpu_custom_call.1} parent=5 // pred_check_branch
        %304 = sbr.rel (%p301) target = $region56
      $region55: #{tpu_custom_call.1} parent=5 // pred_region
        %s305 = ssub.s32 %s20, 1
        // Predicated region
        $region57: #{tpu_custom_call.1} parent=55 // pred_check
          %p306 = pneg %p151
        $region58: #{tpu_custom_call.1} parent=55 // pred_check_branch
          %308 = sbr.rel (%p306) target = $region60
        $region59: #{tpu_custom_call.1} parent=55 // pred_region
          %309 = dma.done [#allocation4], 128
        $region60: #{tpu_custom_call.1} parent=55 // pred_fallthru
          _
        %p310 = scmp.lt.s32.totalorder %s25, 1
        %s311 = scalar_select %p310, %s25, 1
        %s312 = smul.addr %s311, 16
        %s313 = smul.addr %s312, 8
        %s314 = scalar_lea.vmem %s0, %s313
        %p315 = pneg %p46
        %p316 = pneg %p43
        %p317 = pneg %p67
        %p318 = pneg %p64
        %p319 = pneg %p88
        %p320 = pneg %p85
        %p321 = pneg %p109
        %p322 = pneg %p106
        %p323 = pneg %p130
        %p324 = pneg %p127
        %p325 = pneg %p151
        %p326 = pneg %p148
        %p327 = pneg %p172
        %p328 = pneg %p169
        %p329 = pneg %p193
        %p330 = pneg %p190
        %p331 = pneg %p214
        %p332 = pneg %p211
        %p333 = pneg %p240
        %p334 = pneg %p237
        %s335 = sand.u32 %s227, 1
        %s336 = scalar_lea.sflag [#allocation5], %s335
        %s337 = sand.u32 %s227, 1
        %s338 = smul.addr %s337, 128
        %s339 = scalar_lea.vmem [#allocation6], %s338
        %p340 = scmp.lt.s32.totalorder %s25, 1
        %s341 = scalar_select %p340, %s25, 1
        %s342 = smul.addr %s341, 16
        %s343 = smul.addr %s342, 8
        %s344 = scalar_lea.vmem %s0, %s343
        %v345 = vld [vmem:[%s1] sm:$0xff]
        %v346 = vld [vmem:[%s1 + $0x8] sm:$0xff]
        %v347 = vld [vmem:[%s1 + $0x10] sm:$0xff]
        %v348 = vld [vmem:[%s1 + $0x18] sm:$0xff]
        %v349 = vld [vmem:[%s1 + $0x20] sm:$0xff]
        %v350 = vld [vmem:[%s1 + $0x28] sm:$0xff]
        %v351 = vld [vmem:[%s1 + $0x30] sm:$0xff]
        %v352 = vld [vmem:[%s1 + $0x38] sm:$0xff]
        %v353 = vld [vmem:[%s1 + $0x40] sm:$0xff]
        %v354 = vld [vmem:[%s1 + $0x48] sm:$0xff]
        %v355 = vld [vmem:[%s1 + $0x50] sm:$0xff]
        %v356 = vld [vmem:[%s1 + $0x58] sm:$0xff]
        %v357 = vld [vmem:[%s1 + $0x60] sm:$0xff]
        %v358 = vld [vmem:[%s1 + $0x68] sm:$0xff]
        %v359 = vld [vmem:[%s1 + $0x70] sm:$0xff]
        %v360 = vld [vmem:[%s1 + $0x78] sm:$0xff]
        %v361 = vld [vmem:[%s1 + $0x80] sm:$0xff]
        %v362 = vld [vmem:[%s1 + $0x88] sm:$0xff]
        %v363 = vld [vmem:[%s1 + $0x90] sm:$0xff]
        %v364 = vld [vmem:[%s1 + $0x98] sm:$0xff]
        %v365 = vld [vmem:[%s1 + $0xa0] sm:$0xff]
        %v366 = vld [vmem:[%s1 + $0xa8] sm:$0xff]
        %v367 = vld [vmem:[%s1 + $0xb0] sm:$0xff]
        %v368 = vld [vmem:[%s1 + $0xb8] sm:$0xff]
        %v369 = vld [vmem:[%s1 + $0xc0] sm:$0xff]
        %v370 = vld [vmem:[%s1 + $0xc8] sm:$0xff]
        %v371 = vld [vmem:[%s1 + $0xd0] sm:$0xff]
        %v372 = vld [vmem:[%s1 + $0xd8] sm:$0xff]
        %v373 = vld [vmem:[%s1 + $0xe0] sm:$0xff]
        %v374 = vld [vmem:[%s1 + $0xe8] sm:$0xff]
        %v375 = vld [vmem:[%s1 + $0xf0] sm:$0xff]
        %v376 = vld [vmem:[%s1 + $0xf8] sm:$0xff]
        %v377 = vld [vmem:[%s2] sm:$0xff]
        %v378 = vld [vmem:[%s2 + $0x8] sm:$0xff]
        %v379 = vld [vmem:[%s2 + $0x10] sm:$0xff]
        %v380 = vld [vmem:[%s2 + $0x18] sm:$0xff]
        %v381 = vld [vmem:[%s3] sm:$0xff]
        %v382 = vld [vmem:[%s3 + $0x8] sm:$0xff]
        %v383 = vld [vmem:[%s3 + $0x10] sm:$0xff]
        %v384 = vld [vmem:[%s3 + $0x18] sm:$0xff]
        %v385 = vld [vmem:[#allocation3] sm:$0xff]
        %v386 = vld [vmem:[%s6] sm:$0xff]
        %v387 = vld [vmem:[%s7] sm:$0xff]
        %v388 = vld [vmem:[%s7 + $0x8] sm:$0xff]
        %v389 = vld [vmem:[%s7 + $0x10] sm:$0xff]
        %v390 = vld [vmem:[%s7 + $0x18] sm:$0xff]
        %v391 = vld [vmem:[%s7 + $0x20] sm:$0xff]
        %v392 = vld [vmem:[%s7 + $0x28] sm:$0xff]
        %v393 = vld [vmem:[%s7 + $0x30] sm:$0xff]
        %v394 = vld [vmem:[%s7 + $0x38] sm:$0xff]
        %s395 = sld [smem:[#allocation2]]
        %v396 = vld [vmem:[%s344] sm:$0xff]
        %v397 = vld [vmem:[%s344 + $0x8] sm:$0xff]
        %v398 = vld [vmem:[%s344 + $0x10] sm:$0xff]
        %v399 = vld [vmem:[%s344 + $0x18] sm:$0xff]
        %v400 = vld [vmem:[%s344 + $0x20] sm:$0xff]
        %v401 = vld [vmem:[%s344 + $0x28] sm:$0xff]
        %v402 = vld [vmem:[%s344 + $0x30] sm:$0xff]
        %v403 = vld [vmem:[%s344 + $0x38] sm:$0xff]
        %v404 = vld [vmem:[%s344 + $0x40] sm:$0xff]
        %v405 = vld [vmem:[%s344 + $0x48] sm:$0xff]
        %v406 = vld [vmem:[%s344 + $0x50] sm:$0xff]
        %v407 = vld [vmem:[%s344 + $0x58] sm:$0xff]
        %v408 = vld [vmem:[%s344 + $0x60] sm:$0xff]
        %v409 = vld [vmem:[%s344 + $0x68] sm:$0xff]
        %v410 = vld [vmem:[%s344 + $0x70] sm:$0xff]
        %v411 = vld [vmem:[%s344 + $0x78] sm:$0xff]
        %412 = vmatprep.subr.mxu0 0.0
        %413 = vmatpush1.msra.mxu0 %v345
        %414 = vmatprep.subr.mxu0 0.0
        %415 = vmatpush1.msra.mxu0 %v346
        %416 = vmatprep.subr.mxu0 0.0
        %417 = vmatpush1.msra.mxu0 %v347
        %418 = vmatprep.subr.mxu0 0.0
        %419 = vmatpush1.msra.mxu0 %v348
        %420 = vmatprep.subr.mxu0 0.0
        %421 = vmatpush1.msra.mxu0 %v349
        %422 = vmatprep.subr.mxu0 0.0
        %423 = vmatpush1.msra.mxu0 %v350
        %424 = vmatprep.subr.mxu0 0.0
        %425 = vmatpush1.msra.mxu0 %v351
        %426 = vmatprep.subr.mxu0 0.0
        %427 = vmatpush1.msra.mxu0 %v352
        %428 = vmatprep.subr.mxu0 0.0
        %429 = vmatpush1.msra.mxu0 %v353
        %430 = vmatprep.subr.mxu0 0.0
        %431 = vmatpush1.msra.mxu0 %v354
        %432 = vmatprep.subr.mxu0 0.0
        %433 = vmatpush1.msra.mxu0 %v355
        %434 = vmatprep.subr.mxu0 0.0
        %435 = vmatpush1.msra.mxu0 %v356
        %436 = vmatprep.subr.mxu0 0.0
        %437 = vmatpush1.msra.mxu0 %v357
        %438 = vmatprep.subr.mxu0 0.0
        %439 = vmatpush1.msra.mxu0 %v358
        %440 = vmatprep.subr.mxu0 0.0
        %441 = vmatpush1.msra.mxu0 %v359
        %442 = vmatprep.subr.mxu0 0.0
        %443 = vmatpush1.msra.mxu0 %v360
        %444 = vmatprep.subr.mxu0 0.0
        %445 = vmatpush1.msra.mxu0 %v361
        %446 = vmatprep.subr.mxu0 0.0
        %447 = vmatpush1.msra.mxu0 %v362
        %448 = vmatprep.subr.mxu0 0.0
        %449 = vmatpush1.msra.mxu0 %v363
        %450 = vmatprep.subr.mxu0 0.0
        %451 = vmatpush1.msra.mxu0 %v364
        %452 = vmatprep.subr.mxu0 0.0
        %453 = vmatpush1.msra.mxu0 %v365
        %454 = vmatprep.subr.mxu0 0.0
        %455 = vmatpush1.msra.mxu0 %v366
        %456 = vmatprep.subr.mxu0 0.0
        %457 = vmatpush1.msra.mxu0 %v367
        %458 = vmatprep.subr.mxu0 0.0
        %459 = vmatpush1.msra.mxu0 %v368
        %460 = vmatprep.subr.mxu0 0.0
        %461 = vmatpush1.msra.mxu0 %v369
        %462 = vmatprep.subr.mxu0 0.0
        %463 = vmatpush1.msra.mxu0 %v370
        %464 = vmatprep.subr.mxu0 0.0
        %465 = vmatpush1.msra.mxu0 %v371
        %466 = vmatprep.subr.mxu0 0.0
        %467 = vmatpush1.msra.mxu0 %v372
        %468 = vmatprep.subr.mxu0 0.0
        %469 = vmatpush1.msra.mxu0 %v373
        %470 = vmatprep.subr.mxu0 0.0
        %471 = vmatpush1.msra.mxu0 %v374
        %472 = vmatprep.subr.mxu0 0.0
        %473 = vmatpush1.msra.mxu0 %v375
        %474 = vmatprep.subr.mxu0 0.0
        %475 = vmatpush1.msra.mxu0 %v376
        %476 = vmatprep.mubr.f32.mxu0 %v397
        %477 = vmatmul.mubr.f32.gmra.mrb[0].mxu0 %v396
        %v478 = vpop.f32.mrb[0].mxu0
        %v479 = vadd.f32 0.0, %v478
        %v480 = vpop.f32.mrb[0].mxu0
        %481 = vmatprep.mubr.f32.mxu0 %v399
        %482 = vmatmul.mubr.f32.gmra.mrb[0].mxu0 %v398
        %v483 = vpop.f32.mrb[0].mxu0
        %v484 = vadd.f32 0.0, %v483
        %v485 = vpop.f32.mrb[0].mxu0
        %486 = vmatprep.mubr.f32.mxu0 %v401
        %487 = vmatmul.mubr.f32.gmra.mrb[0].mxu0 %v400
        %v488 = vpop.f32.mrb[0].mxu0
        %v489 = vadd.f32 0.0, %v488
        %v490 = vpop.f32.mrb[0].mxu0
        %491 = vmatprep.mubr.f32.mxu0 %v403
        %492 = vmatmul.mubr.f32.gmra.mrb[0].mxu0 %v402
        %v493 = vpop.f32.mrb[0].mxu0
        %v494 = vadd.f32 0.0, %v493
        %v495 = vpop.f32.mrb[0].mxu0
        %496 = vmatprep.mubr.f32.mxu0 %v405
        %497 = vmatmul.mubr.f32.gmra.mrb[0].mxu0 %v404
        %v498 = vpop.f32.mrb[0].mxu0
        %v499 = vadd.f32 0.0, %v498
        %v500 = vpop.f32.mrb[0].mxu0
        %501 = vmatprep.mubr.f32.mxu0 %v407
        %502 = vmatmul.mubr.f32.gmra.mrb[0].mxu0 %v406
        %v503 = vpop.f32.mrb[0].mxu0
        %v504 = vadd.f32 0.0, %v503
        %v505 = vpop.f32.mrb[0].mxu0
        %506 = vmatprep.mubr.f32.mxu0 %v409
        %507 = vmatmul.mubr.f32.gmra.mrb[0].mxu0 %v408
        %v508 = vpop.f32.mrb[0].mxu0
        %v509 = vadd.f32 0.0, %v508
        %v510 = vpop.f32.mrb[0].mxu0
        %511 = vmatprep.mubr.f32.mxu0 %v411
        %512 = vmatmul.mubr.f32.gmra.mrb[0].mxu0 %v410
        %v513 = vpop.f32.mrb[0].mxu0
        %v514 = vadd.f32 0.0, %v513
        %v515 = vpop.f32.mrb[0].mxu0
        %516 = vdwg.mxu0
        %518 = vset.pattern.permute.xlu0 0
        %519 = vperm.xlu0 %518, %v386
        %v520 = vpop.permute.xlu0 %519
        %vm522 = vcmask 523264
        %v524 = vsel %vm522, %v385, 0
        %526 = vmatprep.subr.mxu0 0.0
        %527 = vmatpush1.msra.mxu0 %v479
        %528 = vmatprep.subr.mxu0 0.0
        %529 = vmatpush1.msra.mxu0 %v484
        %530 = vmatprep.subr.mxu0 0.0
        %531 = vmatpush1.msra.mxu0 %v489
        %532 = vmatprep.subr.mxu0 0.0
        %533 = vmatpush1.msra.mxu0 %v494
        %534 = vmatprep.subr.mxu0 0.0
        %535 = vmatpush1.msra.mxu0 %v499
        %536 = vmatprep.subr.mxu0 0.0
        %537 = vmatpush1.msra.mxu0 %v504
        %538 = vmatprep.subr.mxu0 0.0
        %539 = vmatpush1.msra.mxu0 %v509
        %540 = vmatprep.subr.mxu0 0.0
        %541 = vmatpush1.msra.mxu0 %v514
        %542 = vmatprep.subr.mxu0 0.0
        %543 = vmatpush1.msra.mxu0 0.0
        %544 = vmatprep.subr.mxu0 0.0
        %545 = vmatpush1.msra.mxu0 0.0
        %546 = vmatprep.subr.mxu0 0.0
        %547 = vmatpush1.msra.mxu0 0.0
        %548 = vmatprep.subr.mxu0 0.0
        %549 = vmatpush1.msra.mxu0 0.0
        %550 = vmatprep.subr.mxu0 0.0
        %551 = vmatpush1.msra.mxu0 0.0
        %552 = vmatprep.subr.mxu0 0.0
        %553 = vmatpush1.msra.mxu0 0.0
        %554 = vmatprep.subr.mxu0 0.0
        %555 = vmatpush1.msra.mxu0 0.0
        %556 = vmatprep.subr.mxu0 0.0
        %557 = vmatpush1.msra.mxu0 0.0
        %558 = vmatprep.subr.mxu0 0.0
        %559 = vmatpush1.msra.mxu0 0.0
        %560 = vmatprep.subr.mxu0 0.0
        %561 = vmatpush1.msra.mxu0 0.0
        %562 = vmatprep.subr.mxu0 0.0
        %563 = vmatpush1.msra.mxu0 0.0
        %564 = vmatprep.subr.mxu0 0.0
        %565 = vmatpush1.msra.mxu0 0.0
        %566 = vmatprep.subr.mxu0 0.0
        %567 = vmatpush1.msra.mxu0 0.0
        %568 = vmatprep.subr.mxu0 0.0
        %569 = vmatpush1.msra.mxu0 0.0
        %570 = vmatprep.subr.mxu0 0.0
        %571 = vmatpush1.msra.mxu0 0.0
        %572 = vmatprep.subr.mxu0 0.0
        %573 = vmatpush1.msra.mxu0 0.0
        %574 = vmatprep.subr.mxu0 0.0
        %575 = vmatpush1.msra.mxu0 0.0
        %576 = vmatprep.subr.mxu0 0.0
        %577 = vmatpush1.msra.mxu0 0.0
        %578 = vmatprep.subr.mxu0 0.0
        %579 = vmatpush1.msra.mxu0 0.0
        %580 = vmatprep.subr.mxu0 0.0
        %581 = vmatpush1.msra.mxu0 0.0
        %582 = vmatprep.subr.mxu0 0.0
        %583 = vmatpush1.msra.mxu0 0.0
        %584 = vmatprep.subr.mxu0 0.0
        %585 = vmatpush1.msra.mxu0 0.0
        %586 = vmatprep.subr.mxu0 0.0
        %587 = vmatpush1.msra.mxu0 0.0
        %588 = vmatprep.subr.mxu0 0.0
        %589 = vmatpush1.msra.mxu0 0.0
        %590 = vmatprep.mubr.f32.mxu0 0.0
        %591 = vmatmul.mubr.f32.gmra.mrb[0].mxu0 %v524
        %v592 = vpop.f32.mrb[0].mxu0
        %v593 = vadd.f32 %v520, %v592
        %v594 = vpop.f32.mrb[0].mxu0
        %595 = vdwg.mxu0
        %v596 = vmax.f32 %v593, 0.0
        %vm597 = vcmask 64512
        %v599 = vsel %vm597, %v387, 0
        %v602 = vsel %vm597, %v388, 0
        %v605 = vsel %vm597, %v389, 0
        %v608 = vsel %vm597, %v390, 0
        %v611 = vsel %vm597, %v391, 0
        %v614 = vsel %vm597, %v392, 0
        %v617 = vsel %vm597, %v393, 0
        %v620 = vsel %vm597, %v394, 0
        %622 = vmatprep.subr.mxu0 0.0
        %623 = vmatpush1.msra.mxu0 %v596
        %624 = vmatprep.subr.mxu0 0.0
        %625 = vmatpush1.msra.mxu0 0.0
        %626 = vmatprep.subr.mxu0 0.0
        %627 = vmatpush1.msra.mxu0 0.0
        %628 = vmatprep.subr.mxu0 0.0
        %629 = vmatpush1.msra.mxu0 0.0
        %630 = vmatprep.subr.mxu0 0.0
        %631 = vmatpush1.msra.mxu0 0.0
        %632 = vmatprep.subr.mxu0 0.0
        %633 = vmatpush1.msra.mxu0 0.0
        %634 = vmatprep.subr.mxu0 0.0
        %635 = vmatpush1.msra.mxu0 0.0
        %636 = vmatprep.subr.mxu0 0.0
        %637 = vmatpush1.msra.mxu0 0.0
        %638 = vmatprep.subr.mxu0 0.0
        %639 = vmatpush1.msra.mxu0 0.0
        %640 = vmatprep.subr.mxu0 0.0
        %641 = vmatpush1.msra.mxu0 0.0
        %642 = vmatprep.subr.mxu0 0.0
        %643 = vmatpush1.msra.mxu0 0.0
        %644 = vmatprep.subr.mxu0 0.0
        %645 = vmatpush1.msra.mxu0 0.0
        %646 = vmatprep.subr.mxu0 0.0
        %647 = vmatpush1.msra.mxu0 0.0
        %648 = vmatprep.subr.mxu0 0.0
        %649 = vmatpush1.msra.mxu0 0.0
        %650 = vmatprep.subr.mxu0 0.0
        %651 = vmatpush1.msra.mxu0 0.0
        %652 = vmatprep.subr.mxu0 0.0
        %653 = vmatpush1.msra.mxu0 0.0
        %654 = vmatprep.subr.mxu0 0.0
        %655 = vmatpush1.msra.mxu0 0.0
        %656 = vmatprep.subr.mxu0 0.0
        %657 = vmatpush1.msra.mxu0 0.0
        %658 = vmatprep.subr.mxu0 0.0
        %659 = vmatpush1.msra.mxu0 0.0
        %660 = vmatprep.subr.mxu0 0.0
        %661 = vmatpush1.msra.mxu0 0.0
        %662 = vmatprep.subr.mxu0 0.0
        %663 = vmatpush1.msra.mxu0 0.0
        %664 = vmatprep.subr.mxu0 0.0
        %665 = vmatpush1.msra.mxu0 0.0
        %666 = vmatprep.subr.mxu0 0.0
        %667 = vmatpush1.msra.mxu0 0.0
        %668 = vmatprep.subr.mxu0 0.0
        %669 = vmatpush1.msra.mxu0 0.0
        %670 = vmatprep.subr.mxu0 0.0
        %671 = vmatpush1.msra.mxu0 0.0
        %672 = vmatprep.subr.mxu0 0.0
        %673 = vmatpush1.msra.mxu0 0.0
        %674 = vmatprep.subr.mxu0 0.0
        %675 = vmatpush1.msra.mxu0 0.0
        %676 = vmatprep.subr.mxu0 0.0
        %677 = vmatpush1.msra.mxu0 0.0
        %678 = vmatprep.subr.mxu0 0.0
        %679 = vmatpush1.msra.mxu0 0.0
        %680 = vmatprep.subr.mxu0 0.0
        %681 = vmatpush1.msra.mxu0 0.0
        %682 = vmatprep.subr.mxu0 0.0
        %683 = vmatpush1.msra.mxu0 0.0
        %684 = vmatprep.subr.mxu0 0.0
        %685 = vmatpush1.msra.mxu0 0.0
        %686 = vmatprep.mubr.f32.mxu0 0.0
        %687 = vmatmul.mubr.f32.gmra.mrb[0].mxu0 %v599
        %v688 = vpop.f32.mrb[0].mxu0
        %v689 = vadd.f32 0.0, %v688
        %v690 = vpop.f32.mrb[0].mxu0
        %691 = vmatprep.mubr.f32.mxu0 0.0
        %692 = vmatmul.mubr.f32.gmra.mrb[0].mxu0 %v602
        %v693 = vpop.f32.mrb[0].mxu0
        %v694 = vadd.f32 0.0, %v693
        %v695 = vpop.f32.mrb[0].mxu0
        %696 = vmatprep.mubr.f32.mxu0 0.0
        %697 = vmatmul.mubr.f32.gmra.mrb[0].mxu0 %v605
        %v698 = vpop.f32.mrb[0].mxu0
        %v699 = vadd.f32 0.0, %v698
        %v700 = vpop.f32.mrb[0].mxu0
        %701 = vmatprep.mubr.f32.mxu0 0.0
        %702 = vmatmul.mubr.f32.gmra.mrb[0].mxu0 %v608
        %v703 = vpop.f32.mrb[0].mxu0
        %v704 = vadd.f32 0.0, %v703
        %v705 = vpop.f32.mrb[0].mxu0
        %706 = vmatprep.mubr.f32.mxu0 0.0
        %707 = vmatmul.mubr.f32.gmra.mrb[0].mxu0 %v611
        %v708 = vpop.f32.mrb[0].mxu0
        %v709 = vadd.f32 0.0, %v708
        %v710 = vpop.f32.mrb[0].mxu0
        %711 = vmatprep.mubr.f32.mxu0 0.0
        %712 = vmatmul.mubr.f32.gmra.mrb[0].mxu0 %v614
        %v713 = vpop.f32.mrb[0].mxu0
        %v714 = vadd.f32 0.0, %v713
        %v715 = vpop.f32.mrb[0].mxu0
        %716 = vmatprep.mubr.f32.mxu0 0.0
        %717 = vmatmul.mubr.f32.gmra.mrb[0].mxu0 %v617
        %v718 = vpop.f32.mrb[0].mxu0
        %v719 = vadd.f32 0.0, %v718
        %v720 = vpop.f32.mrb[0].mxu0
        %721 = vmatprep.mubr.f32.mxu0 0.0
        %722 = vmatmul.mubr.f32.gmra.mrb[0].mxu0 %v620
        %v723 = vpop.f32.mrb[0].mxu0
        %v724 = vadd.f32 0.0, %v723
        %v725 = vpop.f32.mrb[0].mxu0
        %726 = vdwg.mxu0
        %v727 = vxor.u32 %v689, 2147483648
        %v728 = vxor.u32 %v694, 2147483648
        %v729 = vxor.u32 %v699, 2147483648
        %v730 = vxor.u32 %v704, 2147483648
        %v731 = vxor.u32 %v709, 2147483648
        %v732 = vxor.u32 %v714, 2147483648
        %v733 = vxor.u32 %v719, 2147483648
        %v734 = vxor.u32 %v724, 2147483648
        %v735 = vmul.f32 %v727, 1.442695
        %v736 = vpow.pop %v735
        %v737 = vmul.f32 %v728, 1.442695
        %v738 = vpow.pop %v737
        %v739 = vmul.f32 %v729, 1.442695
        %v740 = vpow.pop %v739
        %v741 = vmul.f32 %v730, 1.442695
        %v742 = vpow.pop %v741
        %v743 = vmul.f32 %v731, 1.442695
        %v744 = vpow.pop %v743
        %v745 = vmul.f32 %v732, 1.442695
        %v746 = vpow.pop %v745
        %v747 = vmul.f32 %v733, 1.442695
        %v748 = vpow.pop %v747
        %v749 = vmul.f32 %v734, 1.442695
        %v750 = vpow.pop %v749
        %v751 = vadd.f32 %v736, 1.0
        %v752 = vadd.f32 %v738, 1.0
        %v753 = vadd.f32 %v740, 1.0
        %v754 = vadd.f32 %v742, 1.0
        %v755 = vadd.f32 %v744, 1.0
        %v756 = vadd.f32 %v746, 1.0
        %v757 = vadd.f32 %v748, 1.0
        %v758 = vadd.f32 %v750, 1.0
        %v759 = vrcp.pop %v751
        %v760 = vmul.f32 1.0, %v759
        %v761 = vrcp.pop %v752
        %v762 = vmul.f32 1.0, %v761
        %v763 = vrcp.pop %v753
        %v764 = vmul.f32 1.0, %v763
        %v765 = vrcp.pop %v754
        %v766 = vmul.f32 1.0, %v765
        %v767 = vrcp.pop %v755
        %v768 = vmul.f32 1.0, %v767
        %v769 = vrcp.pop %v756
        %v770 = vmul.f32 1.0, %v769
        %v771 = vrcp.pop %v757
        %v772 = vmul.f32 1.0, %v771
        %v773 = vrcp.pop %v758
        %v774 = vmul.f32 1.0, %v773
        %vm775 = vcmask 130048
        %v777 = vsel %vm775, %v760, 0
        %v780 = vsel %vm775, %v762, 0
        %v783 = vsel %vm775, %v764, 0
        %v786 = vsel %vm775, %v766, 0
        %v789 = vsel %vm775, %v768, 0
        %v792 = vsel %vm775, %v770, 0
        %v795 = vsel %vm775, %v772, 0
        %v798 = vsel %vm775, %v774, 0
        %800 = vmatprep.subr.mxu0 %v378
        %801 = vmatpush1.msra.mxu0 %v377
        %802 = vmatprep.subr.mxu0 %v380
        %803 = vmatpush1.msra.mxu0 %v379
        %804 = vmatprep.subr.mxu0 0.0
        %805 = vmatpush1.msra.mxu0 0.0
        %806 = vmatprep.subr.mxu0 0.0
        %807 = vmatpush1.msra.mxu0 0.0
        %808 = vmatprep.subr.mxu0 0.0
        %809 = vmatpush1.msra.mxu0 0.0
        %810 = vmatprep.subr.mxu0 0.0
        %811 = vmatpush1.msra.mxu0 0.0
        %812 = vmatprep.subr.mxu0 0.0
        %813 = vmatpush1.msra.mxu0 0.0
        %814 = vmatprep.subr.mxu0 0.0
        %815 = vmatpush1.msra.mxu0 0.0
        %816 = vmatprep.subr.mxu0 0.0
        %817 = vmatpush1.msra.mxu0 0.0
        %818 = vmatprep.subr.mxu0 0.0
        %819 = vmatpush1.msra.mxu0 0.0
        %820 = vmatprep.subr.mxu0 0.0
        %821 = vmatpush1.msra.mxu0 0.0
        %822 = vmatprep.subr.mxu0 0.0
        %823 = vmatpush1.msra.mxu0 0.0
        %824 = vmatprep.subr.mxu0 0.0
        %825 = vmatpush1.msra.mxu0 0.0
        %826 = vmatprep.subr.mxu0 0.0
        %827 = vmatpush1.msra.mxu0 0.0
        %828 = vmatprep.subr.mxu0 0.0
        %829 = vmatpush1.msra.mxu0 0.0
        %830 = vmatprep.subr.mxu0 0.0
        %831 = vmatpush1.msra.mxu0 0.0
        %832 = vmatprep.subr.mxu0 0.0
        %833 = vmatpush1.msra.mxu0 0.0
        %834 = vmatprep.subr.mxu0 0.0
        %835 = vmatpush1.msra.mxu0 0.0
        %836 = vmatprep.subr.mxu0 0.0
        %837 = vmatpush1.msra.mxu0 0.0
        %838 = vmatprep.subr.mxu0 0.0
        %839 = vmatpush1.msra.mxu0 0.0
        %840 = vmatprep.subr.mxu0 0.0
        %841 = vmatpush1.msra.mxu0 0.0
        %842 = vmatprep.subr.mxu0 0.0
        %843 = vmatpush1.msra.mxu0 0.0
        %844 = vmatprep.subr.mxu0 0.0
        %845 = vmatpush1.msra.mxu0 0.0
        %846 = vmatprep.subr.mxu0 0.0
        %847 = vmatpush1.msra.mxu0 0.0
        %848 = vmatprep.subr.mxu0 0.0
        %849 = vmatpush1.msra.mxu0 0.0
        %850 = vmatprep.subr.mxu0 0.0
        %851 = vmatpush1.msra.mxu0 0.0
        %852 = vmatprep.subr.mxu0 0.0
        %853 = vmatpush1.msra.mxu0 0.0
        %854 = vmatprep.subr.mxu0 0.0
        %855 = vmatpush1.msra.mxu0 0.0
        %856 = vmatprep.subr.mxu0 0.0
        %857 = vmatpush1.msra.mxu0 0.0
        %858 = vmatprep.subr.mxu0 0.0
        %859 = vmatpush1.msra.mxu0 0.0
        %860 = vmatprep.subr.mxu0 0.0
        %861 = vmatpush1.msra.mxu0 0.0
        %862 = vmatprep.subr.mxu0 0.0
        %863 = vmatpush1.msra.mxu0 0.0
        %864 = vmatprep.mubr.f32.mxu0 0.0
        %865 = vmatmul.mubr.f32.gmra.mrb[0].mxu0 %v777
        %v866 = vpop.f32.mrb[0].mxu0
        %v867 = vadd.f32 0.0, %v866
        %v868 = vpop.f32.mrb[0].mxu0
        %v869 = vadd.f32 0.0, %v868
        %870 = vmatprep.mubr.f32.mxu0 0.0
        %871 = vmatmul.mubr.f32.gmra.mrb[0].mxu0 %v780
        %v872 = vpop.f32.mrb[0].mxu0
        %v873 = vadd.f32 0.0, %v872
        %v874 = vpop.f32.mrb[0].mxu0
        %v875 = vadd.f32 0.0, %v874
        %876 = vmatprep.mubr.f32.mxu0 0.0
        %877 = vmatmul.mubr.f32.gmra.mrb[0].mxu0 %v783
        %v878 = vpop.f32.mrb[0].mxu0
        %v879 = vadd.f32 0.0, %v878
        %v880 = vpop.f32.mrb[0].mxu0
        %v881 = vadd.f32 0.0, %v880
        %882 = vmatprep.mubr.f32.mxu0 0.0
        %883 = vmatmul.mubr.f32.gmra.mrb[0].mxu0 %v786
        %v884 = vpop.f32.mrb[0].mxu0
        %v885 = vadd.f32 0.0, %v884
        %v886 = vpop.f32.mrb[0].mxu0
        %v887 = vadd.f32 0.0, %v886
        %888 = vmatprep.mubr.f32.mxu0 0.0
        %889 = vmatmul.mubr.f32.gmra.mrb[0].mxu0 %v789
        %v890 = vpop.f32.mrb[0].mxu0
        %v891 = vadd.f32 0.0, %v890
        %v892 = vpop.f32.mrb[0].mxu0
        %v893 = vadd.f32 0.0, %v892
        %894 = vmatprep.mubr.f32.mxu0 0.0
        %895 = vmatmul.mubr.f32.gmra.mrb[0].mxu0 %v792
        %v896 = vpop.f32.mrb[0].mxu0
        %v897 = vadd.f32 0.0, %v896
        %v898 = vpop.f32.mrb[0].mxu0
        %v899 = vadd.f32 0.0, %v898
        %900 = vmatprep.mubr.f32.mxu0 0.0
        %901 = vmatmul.mubr.f32.gmra.mrb[0].mxu0 %v795
        %v902 = vpop.f32.mrb[0].mxu0
        %v903 = vadd.f32 0.0, %v902
        %v904 = vpop.f32.mrb[0].mxu0
        %v905 = vadd.f32 0.0, %v904
        %906 = vmatprep.mubr.f32.mxu0 0.0
        %907 = vmatmul.mubr.f32.gmra.mrb[0].mxu0 %v798
        %v908 = vpop.f32.mrb[0].mxu0
        %v909 = vadd.f32 0.0, %v908
        %v910 = vpop.f32.mrb[0].mxu0
        %v911 = vadd.f32 0.0, %v910
        %912 = vdwg.mxu0
        %913 = vrot.lane.b32.xlu0 %v760, 112
        %v914 = vpop.permute.xlu0 %913
        %915 = vrot.lane.b32.xlu0 %v762, 112
        %v916 = vpop.permute.xlu0 %915
        %917 = vrot.lane.b32.xlu0 %v764, 112
        %v918 = vpop.permute.xlu0 %917
        %919 = vrot.lane.b32.xlu0 %v766, 112
        %v920 = vpop.permute.xlu0 %919
        %921 = vrot.lane.b32.xlu0 %v768, 112
        %v922 = vpop.permute.xlu0 %921
        %923 = vrot.lane.b32.xlu0 %v770, 112
        %v924 = vpop.permute.xlu0 %923
        %925 = vrot.lane.b32.xlu0 %v772, 112
        %v926 = vpop.permute.xlu0 %925
        %927 = vrot.lane.b32.xlu0 %v774, 112
        %v928 = vpop.permute.xlu0 %927
        %v929 = vsel %vm775, %v914, 0
        %v931 = vsel %vm775, %v916, 0
        %v933 = vsel %vm775, %v918, 0
        %v935 = vsel %vm775, %v920, 0
        %v937 = vsel %vm775, %v922, 0
        %v939 = vsel %vm775, %v924, 0
        %v941 = vsel %vm775, %v926, 0
        %v943 = vsel %vm775, %v928, 0
        %945 = vmatprep.subr.mxu0 %v382
        %946 = vmatpush1.msra.mxu0 %v381
        %947 = vmatprep.subr.mxu0 %v384
        %948 = vmatpush1.msra.mxu0 %v383
        %949 = vmatprep.subr.mxu0 0.0
        %950 = vmatpush1.msra.mxu0 0.0
        %951 = vmatprep.subr.mxu0 0.0
        %952 = vmatpush1.msra.mxu0 0.0
        %953 = vmatprep.subr.mxu0 0.0
        %954 = vmatpush1.msra.mxu0 0.0
        %955 = vmatprep.subr.mxu0 0.0
        %956 = vmatpush1.msra.mxu0 0.0
        %957 = vmatprep.subr.mxu0 0.0
        %958 = vmatpush1.msra.mxu0 0.0
        %959 = vmatprep.subr.mxu0 0.0
        %960 = vmatpush1.msra.mxu0 0.0
        %961 = vmatprep.subr.mxu0 0.0
        %962 = vmatpush1.msra.mxu0 0.0
        %963 = vmatprep.subr.mxu0 0.0
        %964 = vmatpush1.msra.mxu0 0.0
        %965 = vmatprep.subr.mxu0 0.0
        %966 = vmatpush1.msra.mxu0 0.0
        %967 = vmatprep.subr.mxu0 0.0
        %968 = vmatpush1.msra.mxu0 0.0
        %969 = vmatprep.subr.mxu0 0.0
        %970 = vmatpush1.msra.mxu0 0.0
        %971 = vmatprep.subr.mxu0 0.0
        %972 = vmatpush1.msra.mxu0 0.0
        %973 = vmatprep.subr.mxu0 0.0
        %974 = vmatpush1.msra.mxu0 0.0
        %975 = vmatprep.subr.mxu0 0.0
        %976 = vmatpush1.msra.mxu0 0.0
        %977 = vmatprep.subr.mxu0 0.0
        %978 = vmatpush1.msra.mxu0 0.0
        %979 = vmatprep.subr.mxu0 0.0
        %980 = vmatpush1.msra.mxu0 0.0
        %981 = vmatprep.subr.mxu0 0.0
        %982 = vmatpush1.msra.mxu0 0.0
        %983 = vmatprep.subr.mxu0 0.0
        %984 = vmatpush1.msra.mxu0 0.0
        %985 = vmatprep.subr.mxu0 0.0
        %986 = vmatpush1.msra.mxu0 0.0
        %987 = vmatprep.subr.mxu0 0.0
        %988 = vmatpush1.msra.mxu0 0.0
        %989 = vmatprep.subr.mxu0 0.0
        %990 = vmatpush1.msra.mxu0 0.0
        %991 = vmatprep.subr.mxu0 0.0
        %992 = vmatpush1.msra.mxu0 0.0
        %993 = vmatprep.subr.mxu0 0.0
        %994 = vmatpush1.msra.mxu0 0.0
        %995 = vmatprep.subr.mxu0 0.0
        %996 = vmatpush1.msra.mxu0 0.0
        %997 = vmatprep.subr.mxu0 0.0
        %998 = vmatpush1.msra.mxu0 0.0
        %999 = vmatprep.subr.mxu0 0.0
        %1000 = vmatpush1.msra.mxu0 0.0
        %1001 = vmatprep.subr.mxu0 0.0
        %1002 = vmatpush1.msra.mxu0 0.0
        %1003 = vmatprep.subr.mxu0 0.0
        %1004 = vmatpush1.msra.mxu0 0.0
        %1005 = vmatprep.subr.mxu0 0.0
        %1006 = vmatpush1.msra.mxu0 0.0
        %1007 = vmatprep.subr.mxu0 0.0
        %1008 = vmatpush1.msra.mxu0 0.0
        %1009 = vmatprep.mubr.f32.mxu0 0.0
        %1010 = vmatmul.mubr.f32.gmra.mrb[0].mxu0 %v929
        %v1011 = vpop.f32.mrb[0].mxu0
        %v1012 = vadd.f32 0.0, %v1011
        %v1013 = vpop.f32.mrb[0].mxu0
        %v1014 = vadd.f32 0.0, %v1013
        %1015 = vmatprep.mubr.f32.mxu0 0.0
        %1016 = vmatmul.mubr.f32.gmra.mrb[0].mxu0 %v931
        %v1017 = vpop.f32.mrb[0].mxu0
        %v1018 = vadd.f32 0.0, %v1017
        %v1019 = vpop.f32.mrb[0].mxu0
        %v1020 = vadd.f32 0.0, %v1019
        %1021 = vmatprep.mubr.f32.mxu0 0.0
        %1022 = vmatmul.mubr.f32.gmra.mrb[0].mxu0 %v933
        %v1023 = vpop.f32.mrb[0].mxu0
        %v1024 = vadd.f32 0.0, %v1023
        %v1025 = vpop.f32.mrb[0].mxu0
        %v1026 = vadd.f32 0.0, %v1025
        %1027 = vmatprep.mubr.f32.mxu0 0.0
        %1028 = vmatmul.mubr.f32.gmra.mrb[0].mxu0 %v935
        %v1029 = vpop.f32.mrb[0].mxu0
        %v1030 = vadd.f32 0.0, %v1029
        %v1031 = vpop.f32.mrb[0].mxu0
        %v1032 = vadd.f32 0.0, %v1031
        %1033 = vmatprep.mubr.f32.mxu0 0.0
        %1034 = vmatmul.mubr.f32.gmra.mrb[0].mxu0 %v937
        %v1035 = vpop.f32.mrb[0].mxu0
        %v1036 = vadd.f32 0.0, %v1035
        %v1037 = vpop.f32.mrb[0].mxu0
        %v1038 = vadd.f32 0.0, %v1037
        %1039 = vmatprep.mubr.f32.mxu0 0.0
        %1040 = vmatmul.mubr.f32.gmra.mrb[0].mxu0 %v939
        %v1041 = vpop.f32.mrb[0].mxu0
        %v1042 = vadd.f32 0.0, %v1041
        %v1043 = vpop.f32.mrb[0].mxu0
        %v1044 = vadd.f32 0.0, %v1043
        %1045 = vmatprep.mubr.f32.mxu0 0.0
        %1046 = vmatmul.mubr.f32.gmra.mrb[0].mxu0 %v941
        %v1047 = vpop.f32.mrb[0].mxu0
        %v1048 = vadd.f32 0.0, %v1047
        %v1049 = vpop.f32.mrb[0].mxu0
        %v1050 = vadd.f32 0.0, %v1049
        %1051 = vmatprep.mubr.f32.mxu0 0.0
        %1052 = vmatmul.mubr.f32.gmra.mrb[0].mxu0 %v943
        %v1053 = vpop.f32.mrb[0].mxu0
        %v1054 = vadd.f32 0.0, %v1053
        %v1055 = vpop.f32.mrb[0].mxu0
        %v1056 = vadd.f32 0.0, %v1055
        %1057 = vdwg.mxu0
        %v1058 = vmul.f32 %v867, %v1012
        %v1059 = vmul.f32 %v869, %v1014
        %v1060 = vmul.f32 %v873, %v1018
        %v1061 = vmul.f32 %v875, %v1020
        %v1062 = vmul.f32 %v879, %v1024
        %v1063 = vmul.f32 %v881, %v1026
        %v1064 = vmul.f32 %v885, %v1030
        %v1065 = vmul.f32 %v887, %v1032
        %v1066 = vmul.f32 %v891, %v1036
        %v1067 = vmul.f32 %v893, %v1038
        %v1068 = vmul.f32 %v897, %v1042
        %v1069 = vmul.f32 %v899, %v1044
        %v1070 = vmul.f32 %v903, %v1048
        %v1071 = vmul.f32 %v905, %v1050
        %v1072 = vmul.f32 %v909, %v1054
        %v1073 = vmul.f32 %v911, %v1056
        %v1075 = vsel %vm522, 0.015625, 0
        %1077 = vmatprep.subr.mxu0 %v397
        %1078 = vmatpush1.msra.mxu0 %v396
        %1079 = vmatprep.subr.mxu0 %v399
        %1080 = vmatpush1.msra.mxu0 %v398
        %1081 = vmatprep.subr.mxu0 %v401
        %1082 = vmatpush1.msra.mxu0 %v400
        %1083 = vmatprep.subr.mxu0 %v403
        %1084 = vmatpush1.msra.mxu0 %v402
        %1085 = vmatprep.subr.mxu0 %v405
        %1086 = vmatpush1.msra.mxu0 %v404
        %1087 = vmatprep.subr.mxu0 %v407
        %1088 = vmatpush1.msra.mxu0 %v406
        %1089 = vmatprep.subr.mxu0 %v409
        %1090 = vmatpush1.msra.mxu0 %v408
        %1091 = vmatprep.subr.mxu0 %v411
        %1092 = vmatpush1.msra.mxu0 %v410
        %1093 = vmatprep.subr.mxu0 0.0
        %1094 = vmatpush1.msra.mxu0 0.0
        %1095 = vmatprep.subr.mxu0 0.0
        %1096 = vmatpush1.msra.mxu0 0.0
        %1097 = vmatprep.subr.mxu0 0.0
        %1098 = vmatpush1.msra.mxu0 0.0
        %1099 = vmatprep.subr.mxu0 0.0
        %1100 = vmatpush1.msra.mxu0 0.0
        %1101 = vmatprep.subr.mxu0 0.0
        %1102 = vmatpush1.msra.mxu0 0.0
        %1103 = vmatprep.subr.mxu0 0.0
        %1104 = vmatpush1.msra.mxu0 0.0
        %1105 = vmatprep.subr.mxu0 0.0
        %1106 = vmatpush1.msra.mxu0 0.0
        %1107 = vmatprep.subr.mxu0 0.0
        %1108 = vmatpush1.msra.mxu0 0.0
        %1109 = vmatprep.subr.mxu0 0.0
        %1110 = vmatpush1.msra.mxu0 0.0
        %1111 = vmatprep.subr.mxu0 0.0
        %1112 = vmatpush1.msra.mxu0 0.0
        %1113 = vmatprep.subr.mxu0 0.0
        %1114 = vmatpush1.msra.mxu0 0.0
        %1115 = vmatprep.subr.mxu0 0.0
        %1116 = vmatpush1.msra.mxu0 0.0
        %1117 = vmatprep.subr.mxu0 0.0
        %1118 = vmatpush1.msra.mxu0 0.0
        %1119 = vmatprep.subr.mxu0 0.0
        %1120 = vmatpush1.msra.mxu0 0.0
        %1121 = vmatprep.subr.mxu0 0.0
        %1122 = vmatpush1.msra.mxu0 0.0
        %1123 = vmatprep.subr.mxu0 0.0
        %1124 = vmatpush1.msra.mxu0 0.0
        %1125 = vmatprep.subr.mxu0 0.0
        %1126 = vmatpush1.msra.mxu0 0.0
        %1127 = vmatprep.subr.mxu0 0.0
        %1128 = vmatpush1.msra.mxu0 0.0
        %1129 = vmatprep.subr.mxu0 0.0
        %1130 = vmatpush1.msra.mxu0 0.0
        %1131 = vmatprep.subr.mxu0 0.0
        %1132 = vmatpush1.msra.mxu0 0.0
        %1133 = vmatprep.subr.mxu0 0.0
        %1134 = vmatpush1.msra.mxu0 0.0
        %1135 = vmatprep.subr.mxu0 0.0
        %1136 = vmatpush1.msra.mxu0 0.0
        %1137 = vmatprep.subr.mxu0 0.0
        %1138 = vmatpush1.msra.mxu0 0.0
        %1139 = vmatprep.subr.mxu0 0.0
        %1140 = vmatpush1.msra.mxu0 0.0
        %1141 = vmatprep.mubr.f32.mxu0 0.0
        %1142 = vmatmul.mubr.f32.gmra.mrb[0].mxu0 %v1075
        %v1143 = vpop.f32.mrb[0].mxu0
        %v1144 = vadd.f32 0.0, %v1143
        %v1145 = vpop.f32.mrb[0].mxu0
        %v1146 = vadd.f32 0.0, %v1145
        %1147 = vdwg.mxu0
        %1148 = vrot.lane.b32.xlu0 %v1144, 17
        %v1149 = vpop.permute.xlu0 %1148
        %1150 = vrot.lane.b32.xlu0 %v1146, 17
        %v1151 = vpop.permute.xlu0 %1150
        %v1152 = vlaneseq
        %v1153 = vand.u32 %v1152, 127
        %vm1154 = vcmp.lt.s32.totalorder %v1153, 17
        %v1155 = vsel %vm1154, %v1149, %v1151
        %v1156 = vsel %vm1154, %v1151, %v1149
        %v1157 = vld [vmem:[%s4] ss:$8 sm:$0x3]
        %v1160 = vcombine.low %v1156, %v1155
        %v1162 = vunpack.c.l.s4 1966171168
        %v1163 = vunpack.c.0.s8 %v1162
        %v1164 = vlaneseq
        %v1165 = vshrl.u32 %v1164, 7
        %v1166 = vsub.s32 %v1163, %v1165
        %v1167 = vrot.slane %v1160, %v1166
        %v1169 = vunpack.c.l.s4 1966171168
        %v1170 = vunpack.c.0.s8 %v1169
        %v1171 = vlaneseq
        %v1172 = vshrl.u32 %v1171, 7
        %v1173 = vsub.s32 %v1170, %v1172
        %v1174 = vrot.slane %v1167, %v1173
        %v1176 = vmul.f32 %v1157, %v1174
        %v1177 = vadd.f32 %v1176, 0.0
        %1178 = vrot.lane.b32.xlu0 %v1144, 16
        %v1179 = vpop.permute.xlu0 %1178
        %1180 = vrot.lane.b32.xlu0 %v1146, 16
        %v1181 = vpop.permute.xlu0 %1180
        %vm1182 = vcmp.lt.s32.totalorder %v1153, 16
        %v1183 = vsel %vm1182, %v1179, %v1181
        %v1184 = vsel %vm1182, %v1181, %v1179
        %s1185 = scalar_lea.vmem %s4, 1
        %v1186 = vld [vmem:[%s1185] ss:$8 sm:$0x3]
        %v1189 = vcombine.low %v1184, %v1183
        %v1191 = vunpack.c.l.s4 1966171168
        %v1192 = vunpack.c.0.s8 %v1191
        %v1193 = vlaneseq
        %v1194 = vshrl.u32 %v1193, 7
        %v1195 = vsub.s32 %v1192, %v1194
        %v1196 = vrot.slane %v1189, %v1195
        %v1198 = vunpack.c.l.s4 1966171168
        %v1199 = vunpack.c.0.s8 %v1198
        %v1200 = vlaneseq
        %v1201 = vshrl.u32 %v1200, 7
        %v1202 = vsub.s32 %v1199, %v1201
        %v1203 = vrot.slane %v1196, %v1202
        %v1205 = vmul.f32 %v1186, %v1203
        %v1206 = vadd.f32 %v1177, %v1205
        %1207 = vrot.lane.b32.xlu0 %v1144, 15
        %v1208 = vpop.permute.xlu0 %1207
        %1209 = vrot.lane.b32.xlu0 %v1146, 15
        %v1210 = vpop.permute.xlu0 %1209
        %vm1211 = vcmp.lt.s32.totalorder %v1153, 15
        %v1212 = vsel %vm1211, %v1208, %v1210
        %v1213 = vsel %vm1211, %v1210, %v1208
        %s1214 = scalar_lea.vmem %s4, 2
        %v1215 = vld [vmem:[%s1214] ss:$8 sm:$0x3]
        %v1218 = vcombine.low %v1213, %v1212
        %v1220 = vunpack.c.l.s4 1966171168
        %v1221 = vunpack.c.0.s8 %v1220
        %v1222 = vlaneseq
        %v1223 = vshrl.u32 %v1222, 7
        %v1224 = vsub.s32 %v1221, %v1223
        %v1225 = vrot.slane %v1218, %v1224
        %v1227 = vunpack.c.l.s4 1966171168
        %v1228 = vunpack.c.0.s8 %v1227
        %v1229 = vlaneseq
        %v1230 = vshrl.u32 %v1229, 7
        %v1231 = vsub.s32 %v1228, %v1230
        %v1232 = vrot.slane %v1225, %v1231
        %v1234 = vmul.f32 %v1215, %v1232
        %v1235 = vadd.f32 %v1206, %v1234
        %1236 = vrot.lane.b32.xlu0 %v1144, 1
        %v1237 = vpop.permute.xlu0 %1236
        %1238 = vrot.lane.b32.xlu0 %v1146, 1
        %v1239 = vpop.permute.xlu0 %1238
        %vm1240 = vcmp.lt.s32.totalorder %v1153, 1
        %v1241 = vsel %vm1240, %v1237, %v1239
        %v1242 = vsel %vm1240, %v1239, %v1237
        %s1243 = scalar_lea.vmem %s4, 3
        %v1244 = vld [vmem:[%s1243] ss:$8 sm:$0x3]
        %v1247 = vcombine.low %v1242, %v1241
        %v1249 = vunpack.c.l.s4 1966171168
        %v1250 = vunpack.c.0.s8 %v1249
        %v1251 = vlaneseq
        %v1252 = vshrl.u32 %v1251, 7
        %v1253 = vsub.s32 %v1250, %v1252
        %v1254 = vrot.slane %v1247, %v1253
        %v1256 = vunpack.c.l.s4 1966171168
        %v1257 = vunpack.c.0.s8 %v1256
        %v1258 = vlaneseq
        %v1259 = vshrl.u32 %v1258, 7
        %v1260 = vsub.s32 %v1257, %v1259
        %v1261 = vrot.slane %v1254, %v1260
        %v1263 = vmul.f32 %v1244, %v1261
        %v1264 = vadd.f32 %v1235, %v1263
        %s1265 = scalar_lea.vmem %s4, 4
        %v1266 = vld [vmem:[%s1265] ss:$8 sm:$0x3]
        %v1269 = vcombine.low %v1144, %v1146
        %v1271 = vunpack.c.l.s4 1966171168
        %v1272 = vunpack.c.0.s8 %v1271
        %v1273 = vlaneseq
        %v1274 = vshrl.u32 %v1273, 7
        %v1275 = vsub.s32 %v1272, %v1274
        %v1276 = vrot.slane %v1269, %v1275
        %v1278 = vunpack.c.l.s4 1966171168
        %v1279 = vunpack.c.0.s8 %v1278
        %v1280 = vlaneseq
        %v1281 = vshrl.u32 %v1280, 7
        %v1282 = vsub.s32 %v1279, %v1281
        %v1283 = vrot.slane %v1276, %v1282
        %v1285 = vmul.f32 %v1266, %v1283
        %v1286 = vadd.f32 %v1264, %v1285
        %1287 = vrot.lane.b32.xlu0 %v1144, 127
        %v1288 = vpop.permute.xlu0 %1287
        %1289 = vrot.lane.b32.xlu0 %v1146, 127
        %v1290 = vpop.permute.xlu0 %1289
        %vm1291 = vcmp.lt.s32.totalorder %v1153, 127
        %v1292 = vsel %vm1291, %v1288, %v1290
        %v1293 = vsel %vm1291, %v1290, %v1288
        %s1294 = scalar_lea.vmem %s4, 5
        %v1295 = vld [vmem:[%s1294] ss:$8 sm:$0x3]
        %v1298 = vcombine.low %v1292, %v1293
        %v1300 = vunpack.c.l.s4 1966171168
        %v1301 = vunpack.c.0.s8 %v1300
        %v1302 = vlaneseq
        %v1303 = vshrl.u32 %v1302, 7
        %v1304 = vsub.s32 %v1301, %v1303
        %v1305 = vrot.slane %v1298, %v1304
        %v1307 = vunpack.c.l.s4 1966171168
        %v1308 = vunpack.c.0.s8 %v1307
        %v1309 = vlaneseq
        %v1310 = vshrl.u32 %v1309, 7
        %v1311 = vsub.s32 %v1308, %v1310
        %v1312 = vrot.slane %v1305, %v1311
        %v1314 = vmul.f32 %v1295, %v1312
        %v1315 = vadd.f32 %v1286, %v1314
        %1316 = vrot.lane.b32.xlu0 %v1144, 113
        %v1317 = vpop.permute.xlu0 %1316
        %1318 = vrot.lane.b32.xlu0 %v1146, 113
        %v1319 = vpop.permute.xlu0 %1318
        %vm1320 = vcmp.lt.s32.totalorder %v1153, 113
        %v1321 = vsel %vm1320, %v1317, %v1319
        %v1322 = vsel %vm1320, %v1319, %v1317
        %s1323 = scalar_lea.vmem %s4, 6
        %v1324 = vld [vmem:[%s1323] ss:$8 sm:$0x3]
        %v1327 = vcombine.low %v1321, %v1322
        %v1329 = vunpack.c.l.s4 1966171168
        %v1330 = vunpack.c.0.s8 %v1329
        %v1331 = vlaneseq
        %v1332 = vshrl.u32 %v1331, 7
        %v1333 = vsub.s32 %v1330, %v1332
        %v1334 = vrot.slane %v1327, %v1333
        %v1336 = vunpack.c.l.s4 1966171168
        %v1337 = vunpack.c.0.s8 %v1336
        %v1338 = vlaneseq
        %v1339 = vshrl.u32 %v1338, 7
        %v1340 = vsub.s32 %v1337, %v1339
        %v1341 = vrot.slane %v1334, %v1340
        %v1343 = vmul.f32 %v1324, %v1341
        %v1344 = vadd.f32 %v1315, %v1343
        %1345 = vrot.lane.b32.xlu0 %v1144, 112
        %v1346 = vpop.permute.xlu0 %1345
        %1347 = vrot.lane.b32.xlu0 %v1146, 112
        %v1348 = vpop.permute.xlu0 %1347
        %vm1349 = vcmp.lt.s32.totalorder %v1153, 112
        %v1350 = vsel %vm1349, %v1346, %v1348
        %v1351 = vsel %vm1349, %v1348, %v1346
        %s1352 = scalar_lea.vmem %s4, 7
        %v1353 = vld [vmem:[%s1352] ss:$8 sm:$0x3]
        %v1356 = vcombine.low %v1350, %v1351
        %v1358 = vunpack.c.l.s4 1966171168
        %v1359 = vunpack.c.0.s8 %v1358
        %v1360 = vlaneseq
        %v1361 = vshrl.u32 %v1360, 7
        %v1362 = vsub.s32 %v1359, %v1361
        %v1363 = vrot.slane %v1356, %v1362
        %v1365 = vunpack.c.l.s4 1966171168
        %v1366 = vunpack.c.0.s8 %v1365
        %v1367 = vlaneseq
        %v1368 = vshrl.u32 %v1367, 7
        %v1369 = vsub.s32 %v1366, %v1368
        %v1370 = vrot.slane %v1363, %v1369
        %v1372 = vmul.f32 %v1353, %v1370
        %v1373 = vadd.f32 %v1344, %v1372
        %1374 = vrot.lane.b32.xlu0 %v1144, 111
        %v1375 = vpop.permute.xlu0 %1374
        %1376 = vrot.lane.b32.xlu0 %v1146, 111
        %v1377 = vpop.permute.xlu0 %1376
        %vm1378 = vcmp.lt.s32.totalorder %v1153, 111
        %v1379 = vsel %vm1378, %v1375, %v1377
        %v1380 = vsel %vm1378, %v1377, %v1375
        %s1381 = scalar_lea.vmem %s4, 16
        %v1382 = vld [vmem:[%s1381] ss:$8 sm:$0x3]
        %v1385 = vcombine.low %v1379, %v1380
        %v1387 = vunpack.c.l.s4 1966171168
        %v1388 = vunpack.c.0.s8 %v1387
        %v1389 = vlaneseq
        %v1390 = vshrl.u32 %v1389, 7
        %v1391 = vsub.s32 %v1388, %v1390
        %v1392 = vrot.slane %v1385, %v1391
        %v1394 = vunpack.c.l.s4 1966171168
        %v1395 = vunpack.c.0.s8 %v1394
        %v1396 = vlaneseq
        %v1397 = vshrl.u32 %v1396, 7
        %v1398 = vsub.s32 %v1395, %v1397
        %v1399 = vrot.slane %v1392, %v1398
        %v1401 = vmul.f32 %v1382, %v1399
        %v1402 = vadd.f32 %v1373, %v1401
        %v1403 = vstv %s395
        %v1404 = vadd.f32 %v1402, %v1403
        %v1405 = vxor.u32 %v1404, 2147483648
        %v1406 = vmul.f32 %v1405, 1.442695
        %v1407 = vpow.pop %v1406
        %v1408 = vadd.f32 %v1407, 1.0
        %v1409 = vrcp.pop %v1408
        %v1410 = vmul.f32 1.0, %v1409
        %v1412 = vlaneseq
        %v1413 = vshrl.u32 %v1412, 7
        %v1414 = vsub.s32 0, %v1413
        %v1415 = vrot.slane %v1410, %v1414
        %v1416 = vlaneseq
        %v1417 = vshrl.u32 %v1416, 7
        %v1418 = vsub.s32 1, %v1417
        %v1419 = vrot.slane %v1410, %v1418
        %v1422 = vadd.f32 %v1058, %v1415
        %v1423 = vadd.f32 %v1059, %v1419
        %v1424 = vadd.f32 %v1060, %v1415
        %v1425 = vadd.f32 %v1061, %v1419
        %v1426 = vadd.f32 %v1062, %v1415
        %v1427 = vadd.f32 %v1063, %v1419
        %v1428 = vadd.f32 %v1064, %v1415
        %v1429 = vadd.f32 %v1065, %v1419
        %v1430 = vadd.f32 %v1066, %v1415
        %v1431 = vadd.f32 %v1067, %v1419
        %v1432 = vadd.f32 %v1068, %v1415
        %v1433 = vadd.f32 %v1069, %v1419
        %v1434 = vadd.f32 %v1070, %v1415
        %v1435 = vadd.f32 %v1071, %v1419
        %v1436 = vadd.f32 %v1072, %v1415
        %v1437 = vadd.f32 %v1073, %v1419
        %v1438 = vmul.f32 %v396, %v1422
        %v1439 = vmul.f32 %v397, %v1423
        %v1440 = vmul.f32 %v398, %v1424
        %v1441 = vmul.f32 %v399, %v1425
        %v1442 = vmul.f32 %v400, %v1426
        %v1443 = vmul.f32 %v401, %v1427
        %v1444 = vmul.f32 %v402, %v1428
        %v1445 = vmul.f32 %v403, %v1429
        %v1446 = vmul.f32 %v404, %v1430
        %v1447 = vmul.f32 %v405, %v1431
        %v1448 = vmul.f32 %v406, %v1432
        %v1449 = vmul.f32 %v407, %v1433
        %v1450 = vmul.f32 %v408, %v1434
        %v1451 = vmul.f32 %v409, %v1435
        %v1452 = vmul.f32 %v410, %v1436
        %v1453 = vmul.f32 %v411, %v1437
        %1454 = vst [vmem:[%s339] sm:$0xff] %v1438
        %1455 = vst [vmem:[%s339 + $0x8] sm:$0xff] %v1439
        %1456 = vst [vmem:[%s339 + $0x10] sm:$0xff] %v1440
        %1457 = vst [vmem:[%s339 + $0x18] sm:$0xff] %v1441
        %1458 = vst [vmem:[%s339 + $0x20] sm:$0xff] %v1442
        %1459 = vst [vmem:[%s339 + $0x28] sm:$0xff] %v1443
        %1460 = vst [vmem:[%s339 + $0x30] sm:$0xff] %v1444
        %1461 = vst [vmem:[%s339 + $0x38] sm:$0xff] %v1445
        %1462 = vst [vmem:[%s339 + $0x40] sm:$0xff] %v1446
        %1463 = vst [vmem:[%s339 + $0x48] sm:$0xff] %v1447
        %1464 = vst [vmem:[%s339 + $0x50] sm:$0xff] %v1448
        %1465 = vst [vmem:[%s339 + $0x58] sm:$0xff] %v1449
        %1466 = vst [vmem:[%s339 + $0x60] sm:$0xff] %v1450
        %1467 = vst [vmem:[%s339 + $0x68] sm:$0xff] %v1451
        %1468 = vst [vmem:[%s339 + $0x70] sm:$0xff] %v1452
        %1469 = vst [vmem:[%s339 + $0x78] sm:$0xff] %v1453
        %s1470 = sand.u32 %s227, 1
        %s1471 = scalar_lea.sflag [#allocation5], %s1470
        %s1472 = sand.u32 %s227, 1
        %s1473 = smul.addr %s1472, 128
        %s1474 = scalar_lea.vmem [#allocation6], %s1473
        // Predicated region
        $region61: #{tpu_custom_call.1} parent=55 // pred_check
          %p1475 = pneg %p237
        $region62: #{tpu_custom_call.1} parent=55 // pred_check_branch
          %1477 = sbr.rel (%p1475) target = $region64
        $region63: #{tpu_custom_call.1} parent=55 // pred_region
          %s1479 = ssub.s32 2048, 2048
          %1480 = vsyncadd %s1471, %s1479
          %s1481 = smul.addr %s25, 16
          %s1482 = smul.addr %s1481, 128
          %s1483 = scalar_lea.hbm %s9, %s1482
          %s1484 = sshll.u32 %s1474, 4
          %s1485 = int_to_ptr.vmem [resolvable:$true] %s1484
          %1490 = dma.vmem_to_hbm [thread:$0]  %s1485, 2048, %s1483, %s1471, 256, 256, 16
        $region64: #{tpu_custom_call.1} parent=55 // pred_fallthru
          _
      $region56: #{tpu_custom_call.1} parent=5 // pred_fallthru
        _
      %p1491 = scmp.le.s32.totalorder 2, %s20
      // Predicated region
      $region65: #{tpu_custom_call.1} parent=5 // pred_check
        %p1492 = pneg %p1491
      $region66: #{tpu_custom_call.1} parent=5 // pred_check_branch
        %1494 = sbr.rel (%p1492) target = $region68
      $region67: #{tpu_custom_call.1} parent=5 // pred_region
        %s1495 = ssub.s32 %s20, 2
        // Predicated region
        $region69: #{tpu_custom_call.1} parent=67 // pred_check
          %p1496 = pneg %p243
        $region70: #{tpu_custom_call.1} parent=67 // pred_check_branch
          %1498 = sbr.rel (%p1496) target = $region72
        $region71: #{tpu_custom_call.1} parent=67 // pred_region
          %s1499 = sand.u32 %s228, 1
          %s1500 = scalar_lea.sflag [#allocation5], %s1499
          %s1501 = sand.u32 %s228, 1
          %s1502 = smul.addr %s1501, 128
          %s1503 = scalar_lea.vmem [#allocation6], %s1502
          %1504 = dma.done %s1500, 2048
        $region72: #{tpu_custom_call.1} parent=67 // pred_fallthru
          _
      $region68: #{tpu_custom_call.1} parent=5 // pred_fallthru
        _
    $region6: #{tpu_custom_call.1} parent=1 // loop_footer
      %s24 = sadd.s32 1, %s20
    $region7: #{tpu_custom_call.1} parent=1 // loop_footer_branch
      %19 = sbr.rel target = $region3
    $region8: #{tpu_custom_call.1} parent=1 // loop_exit
      _
    %1505 = vsyncpa [#allocation4], 1
    %s1506 = scalar_lea.sflag [#allocation4], 1
    %1507 = vsyncpa %s1506, 1
    %1508 = vsyncpa [#allocation5], 1
    %s1509 = scalar_lea.sflag [#allocation5], 1
    %1510 = vsyncpa %s1509, 1

</llo_original>
